<compile_context>
chip_gen: v7x
topology: tpu7x:2x2x1
jax: 0.10.0
libtpu: 0.0.40
codegen_flags: <defaults>
</compile_context>

<pallas_src>
import functools

import jax
import jax.numpy as jnp
import numpy as np
from jax.experimental import pallas as pl
from jax.experimental.pallas import tpu as pltpu


def _mm(a, b):
    return jnp.dot(a, b, preferred_element_type=jnp.float32)


def aatm_kernel(fm_ref, slab_ref, gap_ref, pooled_ref, *, offs):
    b, pb, _, c, hw = fm_ref.shape
    c8 = c // 8
    bp = b * pb

    # Frame loads straight from the VMEM input block (no full-tensor temp).
    x0 = fm_ref[:, :, 0].astype(jnp.float32)     # (b, pb, c, hw)  frames 2i
    x1 = fm_ref[:, :, 1].astype(jnp.float32)     # (b, pb, c, hw)  frames 2i+1

    # feat_para = AdaptiveAvgPool2d((1,1)) -> mean over the spatial (lane) axis
    inv_hw = jnp.float32(1.0 / hw)
    fp0 = (jnp.sum(x0, axis=-1) * inv_hw).reshape(bp, c)
    fp1 = (jnp.sum(x1, axis=-1) * inv_hw).reshape(bp, c)
    fp_all = jnp.concatenate([fp0, fp1], axis=0)            # (2*bp, c)

    # Static slices from the single packed weight slab.
    o_wta, o_bta, o_wa, o_wb, o_bf, o_w2, o_b2 = offs
    w_th_app = slab_ref[o_wta:o_wta + c, 0:2 * c8]          # (c, 2*c8)
    b_th_app = slab_ref[o_bta:o_bta + 1, 0:2 * c8]          # (1, 2*c8)
    w_a = slab_ref[o_wa:o_wa + 2 * c8, 0:c8 + c]            # (2*c8, c8+c)
    w_b = slab_ref[o_wb:o_wb + 2 * c8, 0:c8 + c]            # (2*c8, c8+c)
    b_fused = slab_ref[o_bf:o_bf + 1, 0:c8 + c]             # (1, c8+c)
    ch_w2t = slab_ref[o_w2:o_w2 + c8, 0:c]                  # (c8, c)
    ch_b2 = slab_ref[o_b2:o_b2 + 1, 0:c]                    # (1, c)

    # Fused layer 1: theta_channel (Conv1d k=1 + ReLU) and app_channel
    # layer-1 (Linear + ReLU); both frames of every pair batched on M.
    # z = [cp | ha] lane-wise.
    z = jax.nn.relu(_mm(fp_all, w_th_app) + b_th_app)       # (2*bp, 2*c8)

    # Swap frame-0 / frame-1 row halves with one sublane rotate (XLU slot),
    # instead of sublane/lane concatenates on the MLP critical path.
    z_swap = pltpu.roll(z, shift=bp, axis=0)

    # Fused layer 2: block-diagonal weights compute the mutual-channel hidden
    # (cp @ W1a + cp_swap @ W1b) and the appearance attention (ha @ app_w2)
    # in the same pair of matmuls; no lane concat of (cp_a, cp_b) needed.
    fused = _mm(z, w_a) + _mm(z_swap, w_b) + b_fused        # (2*bp, c8 + c)
    h1 = jax.nn.relu(fused[:, :c8])                         # mutual hidden
    para_app = jax.nn.sigmoid(fused[:, c8:])                # appearance attn

    # mutual channel attention, layer 2
    para_ch = jax.nn.sigmoid(_mm(h1, ch_w2t) + ch_b2)       # (2*bp, c)

    para_00 = para_ch[:bp].reshape(b, pb, c, 1)
    para_01 = para_ch[bp:].reshape(b, pb, c, 1)
    para_0 = para_app[:bp].reshape(b, pb, c, 1)
    para_1 = para_app[bp:].reshape(b, pb, c, 1)

    # gap = (para_00*x0 + para_01*x1)^2 + relu(para_0*x0 + para_1*x1)
    g0 = para_00 * x0 + para_01 * x1
    g1 = jax.nn.relu(para_0 * x0 + para_1 * x1)
    gap = g0 * g0 + g1                                      # (b, pb, c, hw)

    gap_ref[...] = gap.astype(gap_ref.dtype)
    # per-pair spatial average pool, emitted lane-dense as (b, pb*c);
    # the temporal mean over pairs happens in the wrapper.
    pooled_ref[...] = (jnp.sum(gap, axis=-1) * inv_hw).reshape(b, pb * c)


def _pack_slab(pieces):
    """Pack small 2-D f32 arrays into one (8,128)-aligned slab.

    Returns (slab, row_offsets); each piece sits at rows
    [off, off+rows) and columns [0, cols) of the slab.
    """
    offs, r, max_c = [], 0, 0
    for piece in pieces:
        offs.append(r)
        r += -(-piece.shape[0] // 8) * 8
        max_c = max(max_c, piece.shape[1])
    n_rows = -(-r // 8) * 8
    n_cols = -(-max_c // 128) * 128
    slab = jnp.zeros((n_rows, n_cols), jnp.float32)
    for off, piece in zip(offs, pieces):
        slab = slab.at[off:off + piece.shape[0],
                       0:piece.shape[1]].set(piece.astype(jnp.float32))
    return slab, tuple(offs)


def aatm_forward(feat_map, params):
    b, t, c, h, w = feat_map.shape
    assert t % 2 == 0 and c % 8 == 0
    hw = h * w
    p = t // 2
    c8 = c // 8

    # 2 grid steps over the independent pair axis when possible: enough to
    # pipeline the DMAs and to use both v7x TensorCores, while keeping the
    # ~0.35 us/step fixed overhead low.  (See VMEM TODO at top of file.)
    pair_block = p // 2 if (p >= 2 and p % 2 == 0) else 1
    num_steps = p // pair_block

    fm = feat_map.reshape(b, p, 2, c, hw)   # no dtype cast in the wrapper

    # ---- one-time weight prep: fuse, pre-transpose, pack into one slab ----
    theta_wT = params["theta_w"].T                             # (c, c8)
    app_w1T = params["app_w1"].T                               # (c, c8)
    w_th_app = jnp.concatenate([theta_wT, app_w1T], axis=1)    # (c, 2*c8)
    b_th_app = jnp.concatenate([params["theta_b"], params["app_b1"]], axis=1)

    ch_w1aT = params["ch_w1"][:, :c8].T                        # (c8, c8)
    ch_w1bT = params["ch_w1"][:, c8:].T                        # (c8, c8)
    app_w2T = params["app_w2"].T                               # (c8, c)
    # block weights for: fused = z @ W_a + roll(z) @ W_b
    #   output cols [:c8]  -> mutual-channel hidden, cols [c8:] -> app. attn
    w_a = jnp.zeros((2 * c8, c8 + c), jnp.float32)
    w_a = w_a.at[:c8, :c8].set(ch_w1aT)
    w_a = w_a.at[c8:, c8:].set(app_w2T)
    w_b = jnp.zeros((2 * c8, c8 + c), jnp.float32)
    w_b = w_b.at[:c8, :c8].set(ch_w1bT)
    b_fused = jnp.concatenate([params["ch_b1"], params["app_b2"]], axis=1)
    ch_w2T = params["ch_w2"].T                                 # (c8, c)

    slab, offs = _pack_slab(
        [w_th_app, b_th_app, w_a, w_b, b_fused, ch_w2T, params["ch_b2"]])

    kernel = functools.partial(aatm_kernel, offs=offs)

    gap, pooled = pl.pallas_call(
        kernel,
        out_shape=(
            jax.ShapeDtypeStruct((b, p, c, hw), feat_map.dtype),
            jax.ShapeDtypeStruct((b, p * c), jnp.float32),
        ),
        grid_spec=pltpu.PrefetchScalarGridSpec(
            num_scalar_prefetch=0,
            grid=(num_steps,),
            in_specs=[
                pl.BlockSpec((b, pair_block, 2, c, hw),
                             lambda i: (0, i, 0, 0, 0)),
                # TODO(synk): once supported everywhere, mark this constant
                # weight slab single-buffered so it isn't double-buffered.
                pl.BlockSpec(slab.shape, lambda i: (0, 0)),
            ],
            out_specs=[
                pl.BlockSpec((b, pair_block, c, hw), lambda i: (0, i, 0, 0)),
                pl.BlockSpec((b, pair_block * c), lambda i: (0, i)),
            ],
        ),
        compiler_params=pltpu.CompilerParams(
            dimension_semantics=("parallel",)),
    )(fm, slab)

    feature = jnp.mean(pooled.reshape(b, p, c), axis=1)   # temporal mean
    return gap.reshape(b, p, c, h, w), feature


def aatm_reference(feat_map, params):
    """Pure-JAX reference mirroring the PyTorch forward."""
    b, t, c, h, w = feat_map.shape
    hw = h * w
    x = feat_map.reshape(b, t, c, hw).astype(jnp.float32)
    fp = x.mean(-1)                                            # (b, t, c)
    cp = jax.nn.relu(jnp.einsum("btc,oc->bto", fp, params["theta_w"])
                     + params["theta_b"])

    def ch_mlp(v):
        h1 = jax.nn.relu(v @ params["ch_w1"].T + params["ch_b1"])
        return jax.nn.sigmoid(h1 @ params["ch_w2"].T + params["ch_b2"])

    def app_mlp(v):
        h1 = jax.nn.relu(v @ params["app_w1"].T + params["app_b1"])
        return jax.nn.sigmoid(h1 @ params["app_w2"].T + params["app_b2"])

    gaps, feats = [], []
    for i in range(t // 2):
        idx = 2 * i
        para00 = ch_mlp(jnp.concatenate([cp[:, idx], cp[:, idx + 1]], -1))
        para01 = ch_mlp(jnp.concatenate([cp[:, idx + 1], cp[:, idx]], -1))
        para0 = app_mlp(fp[:, idx])
        para1 = app_mlp(fp[:, idx + 1])
        g0 = (para00[:, :, None] * x[:, idx]
              + para01[:, :, None] * x[:, idx + 1]) ** 2
        g1 = jax.nn.relu(para0[:, :, None] * x[:, idx]
                         + para1[:, :, None] * x[:, idx + 1])
        gap = g0 + g1
        gaps.append(gap)
        feats.append(gap.mean(-1))
    gap_map = jnp.stack(gaps, 1).reshape(b, t // 2, c, h, w)
    feature = jnp.stack(feats, 1).mean(1)
    return gap_map, feature


def make_params(key, c):
    c8 = c // 8
    ks = jax.random.split(key, 5)
    # Kaiming-ish deterministic init (biases init to 0, per weights_init_kaiming)
    theta_w = jax.random.normal(ks[0], (c8, c), jnp.float32) * np.sqrt(2.0 / c)
    ch_w1 = jax.random.normal(ks[1], (c8, 2 * c8), jnp.float32) * np.sqrt(2.0 / c8)
    ch_w2 = jax.random.normal(ks[2], (c, c8), jnp.float32) * np.sqrt(2.0 / c)
    app_w1 = jax.random.normal(ks[3], (c8, c), jnp.float32) * np.sqrt(2.0 / c8)
    app_w2 = jax.random.normal(ks[4], (c, c8), jnp.float32) * np.sqrt(2.0 / c)
    return {
        "theta_w": theta_w,
        "theta_b": jnp.zeros((1, c8), jnp.float32),
        "ch_w1": ch_w1,
        "ch_b1": jnp.zeros((1, c8), jnp.float32),
        "ch_w2": ch_w2,
        "ch_b2": jnp.zeros((1, c), jnp.float32),
        "app_w1": app_w1,
        "app_b1": jnp.zeros((1, c8), jnp.float32),
        "app_w2": app_w2,
        "app_b2": jnp.zeros((1, c), jnp.float32),
    }


if __name__ == "__main__":
    b, t, c, h, w = 2, 8, 64, 16, 8   # h*w = 128 (the module bakes in 16*8)
    key = jax.random.PRNGKey(0)
    k_x, k_p = jax.random.split(key)
    feat_map = jax.random.normal(k_x, (b, t, c, h, w), jnp.float32)
    params = make_params(k_p, c)

    fwd = jax.jit(aatm_forward)
    gap_map, feature = jax.block_until_ready(fwd(feat_map, params))
    gap_ref, feat_ref = aatm_reference(feat_map, params)

    np.testing.assert_allclose(np.asarray(gap_map), np.asarray(gap_ref),
                               rtol=1e-4, atol=1e-4)
    np.testing.assert_allclose(np.asarray(feature), np.asarray(feat_ref),
                               rtol=1e-4, atol=1e-4)
    assert gap_map.shape == (b, t // 2, c, h, w)
    assert feature.shape == (b, c)
    print("KERNEL_OK")
</pallas_src>

<mosaic_0001>
module attributes {stable_mosaic.version = 11 : i64} {
  func.func @aatm_kernel(%arg0: i32, %arg1: memref<2x2x2x64x128xf32, #tpu.memory_space<vmem>>, %arg2: memref<128x128xf32, #tpu.memory_space<vmem>>, %arg3: memref<2x2x64x128xf32, #tpu.memory_space<vmem>>, %arg4: memref<2x128xf32, #tpu.memory_space<vmem>>) attributes {dimension_semantics = [#tpu.dimension_semantics<parallel>], iteration_bounds = array<i64: 2>, scalar_prefetch = 0 : i64, scratch_operands = 0 : i64, tpu.core_type = #tpu.core_type<tc>, window_params = [{transform_indices = @transform_0, window_bounds = array<i64: 2, 2, 2, 64, 128>}, {pipeline_mode = #tpu.pipeline_mode<synchronous>, transform_indices = @transform_1, window_bounds = array<i64: 128, 128>}, {transform_indices = @transform_2, window_bounds = array<i64: 2, 2, 64, 128>}, {transform_indices = @transform_3, window_bounds = array<i64: 2, 128>}]} {
    %c0 = arith.constant 0 : index
    %c0_0 = arith.constant 0 : index
    %c0_1 = arith.constant 0 : index
    %c0_2 = arith.constant 0 : index
    %c0_3 = arith.constant 0 : index
    %0 = vector.load %arg1[%c0, %c0_0, %c0_1, %c0_2, %c0_3] : memref<2x2x2x64x128xf32, #tpu.memory_space<vmem>>, vector<2x2x1x64x128xf32>
    %1 = vector.shape_cast %0 : vector<2x2x1x64x128xf32> to vector<2x2x64x128xf32>
    %c0_4 = arith.constant 0 : index
    %c0_5 = arith.constant 0 : index
    %c1 = arith.constant 1 : index
    %c0_6 = arith.constant 0 : index
    %c0_7 = arith.constant 0 : index
    %2 = vector.load %arg1[%c0_4, %c0_5, %c1, %c0_6, %c0_7] : memref<2x2x2x64x128xf32, #tpu.memory_space<vmem>>, vector<2x2x1x64x128xf32>
    %3 = vector.shape_cast %2 : vector<2x2x1x64x128xf32> to vector<2x2x64x128xf32>
    %cst = arith.constant dense<0.000000e+00> : vector<2x2x64xf32>
    %4 = vector.multi_reduction <add>, %1, %cst [3] : vector<2x2x64x128xf32> to vector<2x2x64xf32>
    %cst_8 = arith.constant 7.812500e-03 : f32
    %5 = vector.broadcast %cst_8 : f32 to vector<2x2x64xf32>
    %6 = arith.mulf %4, %5 : vector<2x2x64xf32>
    %7 = vector.shape_cast %6 : vector<2x2x64xf32> to vector<4x64xf32>
    %cst_9 = arith.constant dense<0.000000e+00> : vector<2x2x64xf32>
    %8 = vector.multi_reduction <add>, %3, %cst_9 [3] : vector<2x2x64x128xf32> to vector<2x2x64xf32>
    %cst_10 = arith.constant 7.812500e-03 : f32
    %9 = vector.broadcast %cst_10 : f32 to vector<2x2x64xf32>
    %10 = arith.mulf %8, %9 : vector<2x2x64xf32>
    %11 = vector.shape_cast %10 : vector<2x2x64xf32> to vector<4x64xf32>
    %12 = tpu.concatenate %7, %11 in 0 : vector<4x64xf32>, vector<4x64xf32> -> vector<8x64xf32>
    %c0_11 = arith.constant 0 : index
    %c0_12 = arith.constant 0 : index
    %13 = vector.load %arg2[%c0_11, %c0_12] : memref<128x128xf32, #tpu.memory_space<vmem>>, vector<64x16xf32>
    %c64 = arith.constant 64 : index
    %c0_13 = arith.constant 0 : index
    %14 = vector.load %arg2[%c64, %c0_13] : memref<128x128xf32, #tpu.memory_space<vmem>>, vector<1x16xf32>
    %c72 = arith.constant 72 : index
    %c0_14 = arith.constant 0 : index
    %15 = vector.load %arg2[%c72, %c0_14] : memref<128x128xf32, #tpu.memory_space<vmem>>, vector<16x72xf32>
    %c88 = arith.constant 88 : index
    %c0_15 = arith.constant 0 : index
    %16 = vector.load %arg2[%c88, %c0_15] : memref<128x128xf32, #tpu.memory_space<vmem>>, vector<16x72xf32>
    %c104 = arith.constant 104 : index
    %c0_16 = arith.constant 0 : index
    %17 = vector.load %arg2[%c104, %c0_16] : memref<128x128xf32, #tpu.memory_space<vmem>>, vector<1x72xf32>
    %c112 = arith.constant 112 : index
    %c0_17 = arith.constant 0 : index
    %18 = vector.load %arg2[%c112, %c0_17] : memref<128x128xf32, #tpu.memory_space<vmem>>, vector<8x64xf32>
    %c120 = arith.constant 120 : index
    %c0_18 = arith.constant 0 : index
    %19 = vector.load %arg2[%c120, %c0_18] : memref<128x128xf32, #tpu.memory_space<vmem>>, vector<1x64xf32>
    %cst_19 = arith.constant dense<0.000000e+00> : vector<8x16xf32>
    %20 = tpu.matmul %12, %13, %cst_19 {dimension_numbers = #tpu.dot_dimension_numbers<[1], [0], [0], [1], [0, 0, 1, 1], [], []>} : vector<8x64xf32>, vector<64x16xf32>, vector<8x16xf32> -> vector<8x16xf32>
    %21 = vector.broadcast %14 : vector<1x16xf32> to vector<8x16xf32>
    %22 = arith.addf %20, %21 : vector<8x16xf32>
    %cst_20 = arith.constant 0.000000e+00 : f32
    %23 = vector.broadcast %cst_20 : f32 to vector<8x16xf32>
    %24 = arith.maximumf %22, %23 : vector<8x16xf32>
    %c4_i32 = arith.constant 4 : i32
    %25 = tpu.dynamic_rotate %24 by %c4_i32 dim 0 : vector<8x16xf32>, i32 -> vector<8x16xf32>
    %cst_21 = arith.constant dense<0.000000e+00> : vector<8x72xf32>
    %26 = tpu.matmul %24, %15, %cst_21 {dimension_numbers = #tpu.dot_dimension_numbers<[1], [0], [0], [1], [0, 0, 1, 1], [], []>} : vector<8x16xf32>, vector<16x72xf32>, vector<8x72xf32> -> vector<8x72xf32>
    %cst_22 = arith.constant dense<0.000000e+00> : vector<8x72xf32>
    %27 = tpu.matmul %25, %16, %cst_22 {dimension_numbers = #tpu.dot_dimension_numbers<[1], [0], [0], [1], [0, 0, 1, 1], [], []>} : vector<8x16xf32>, vector<16x72xf32>, vector<8x72xf32> -> vector<8x72xf32>
    %28 = arith.addf %26, %27 : vector<8x72xf32>
    %29 = vector.broadcast %17 : vector<1x72xf32> to vector<8x72xf32>
    %30 = arith.addf %28, %29 : vector<8x72xf32>
    %31 = vector.extract_strided_slice %30 {offsets = [0, 0], sizes = [8, 8], strides = [1, 1]} : vector<8x72xf32> to vector<8x8xf32>
    %cst_23 = arith.constant 0.000000e+00 : f32
    %32 = vector.broadcast %cst_23 : f32 to vector<8x8xf32>
    %33 = arith.maximumf %31, %32 : vector<8x8xf32>
    %34 = vector.extract_strided_slice %30 {offsets = [0, 8], sizes = [8, 64], strides = [1, 1]} : vector<8x72xf32> to vector<8x64xf32>
    %35 = arith.negf %34 : vector<8x64xf32>
    %36 = math.exp %35 : vector<8x64xf32>
    %cst_24 = arith.constant 1.000000e+00 : f32
    %37 = vector.broadcast %cst_24 : f32 to vector<8x64xf32>
    %38 = arith.addf %37, %36 : vector<8x64xf32>
    %39 = arith.divf %37, %38 : vector<8x64xf32>
    %cst_25 = arith.constant dense<0.000000e+00> : vector<8x64xf32>
    %40 = tpu.matmul %33, %18, %cst_25 {dimension_numbers = #tpu.dot_dimension_numbers<[1], [0], [0], [1], [0, 0, 1, 1], [], []>} : vector<8x8xf32>, vector<8x64xf32>, vector<8x64xf32> -> vector<8x64xf32>
    %41 = vector.broadcast %19 : vector<1x64xf32> to vector<8x64xf32>
    %42 = arith.addf %40, %41 : vector<8x64xf32>
    %43 = arith.negf %42 : vector<8x64xf32>
    %44 = math.exp %43 : vector<8x64xf32>
    %cst_26 = arith.constant 1.000000e+00 : f32
    %45 = vector.broadcast %cst_26 : f32 to vector<8x64xf32>
    %46 = arith.addf %45, %44 : vector<8x64xf32>
    %47 = arith.divf %45, %46 : vector<8x64xf32>
    %48 = vector.extract_strided_slice %47 {offsets = [0, 0], sizes = [4, 64], strides = [1, 1]} : vector<8x64xf32> to vector<4x64xf32>
    %49 = vector.shape_cast %48 : vector<4x64xf32> to vector<2x2x64x1xf32>
    %50 = vector.extract_strided_slice %47 {offsets = [4, 0], sizes = [4, 64], strides = [1, 1]} : vector<8x64xf32> to vector<4x64xf32>
    %51 = vector.shape_cast %50 : vector<4x64xf32> to vector<2x2x64x1xf32>
    %52 = vector.extract_strided_slice %39 {offsets = [0, 0], sizes = [4, 64], strides = [1, 1]} : vector<8x64xf32> to vector<4x64xf32>
    %53 = vector.shape_cast %52 : vector<4x64xf32> to vector<2x2x64x1xf32>
    %54 = vector.extract_strided_slice %39 {offsets = [4, 0], sizes = [4, 64], strides = [1, 1]} : vector<8x64xf32> to vector<4x64xf32>
    %55 = vector.shape_cast %54 : vector<4x64xf32> to vector<2x2x64x1xf32>
    %56 = vector.broadcast %49 : vector<2x2x64x1xf32> to vector<2x2x64x128xf32>
    %57 = arith.mulf %56, %1 : vector<2x2x64x128xf32>
    %58 = vector.broadcast %51 : vector<2x2x64x1xf32> to vector<2x2x64x128xf32>
    %59 = arith.mulf %58, %3 : vector<2x2x64x128xf32>
    %60 = arith.addf %57, %59 : vector<2x2x64x128xf32>
    %61 = vector.broadcast %53 : vector<2x2x64x1xf32> to vector<2x2x64x128xf32>
    %62 = arith.mulf %61, %1 : vector<2x2x64x128xf32>
    %63 = vector.broadcast %55 : vector<2x2x64x1xf32> to vector<2x2x64x128xf32>
    %64 = arith.mulf %63, %3 : vector<2x2x64x128xf32>
    %65 = arith.addf %62, %64 : vector<2x2x64x128xf32>
    %cst_27 = arith.constant 0.000000e+00 : f32
    %66 = vector.broadcast %cst_27 : f32 to vector<2x2x64x128xf32>
    %67 = arith.maximumf %65, %66 : vector<2x2x64x128xf32>
    %68 = arith.mulf %60, %60 : vector<2x2x64x128xf32>
    %69 = arith.addf %68, %67 : vector<2x2x64x128xf32>
    %c0_28 = arith.constant 0 : index
    %c0_29 = arith.constant 0 : index
    %c0_30 = arith.constant 0 : index
    %c0_31 = arith.constant 0 : index
    %70 = vector.load %arg3[%c0_28, %c0_29, %c0_30, %c0_31] : memref<2x2x64x128xf32, #tpu.memory_space<vmem>>, vector<2x2x64x128xf32>
    tpu.vector_store %arg3[%c0_28, %c0_29, %c0_30, %c0_31], %69 {strides = array<i32>} : memref<2x2x64x128xf32, #tpu.memory_space<vmem>>, vector<2x2x64x128xf32>,
    %cst_32 = arith.constant dense<0.000000e+00> : vector<2x2x64xf32>
    %71 = vector.multi_reduction <add>, %69, %cst_32 [3] : vector<2x2x64x128xf32> to vector<2x2x64xf32>
    %cst_33 = arith.constant 7.812500e-03 : f32
    %72 = vector.broadcast %cst_33 : f32 to vector<2x2x64xf32>
    %73 = arith.mulf %71, %72 : vector<2x2x64xf32>
    %74 = vector.shape_cast %73 : vector<2x2x64xf32> to vector<2x128xf32>
    %c0_34 = arith.constant 0 : index
    %c0_35 = arith.constant 0 : index
    %75 = vector.load %arg4[%c0_34, %c0_35] : memref<2x128xf32, #tpu.memory_space<vmem>>, vector<2x128xf32>
    tpu.vector_store %arg4[%c0_34, %c0_35], %74 {strides = array<i32>} : memref<2x128xf32, #tpu.memory_space<vmem>>, vector<2x128xf32>,
    return
  }
  func.func @transform_0(%arg0: i32) -> (i32, i32, i32, i32, i32) {
    %c0_i32 = arith.constant 0 : i32
    %c0_i32_0 = arith.constant 0 : i32
    %c0_i32_1 = arith.constant 0 : i32
    %c0_i32_2 = arith.constant 0 : i32
    %c0_i32_3 = arith.constant 0 : i32
    return %c0_i32, %arg0, %c0_i32_0, %c0_i32_1, %c0_i32_2 : i32, i32, i32, i32, i32
  }
  func.func @transform_1(%arg0: i32) -> (i32, i32) {
    %c0_i32 = arith.constant 0 : i32
    %c0_i32_0 = arith.constant 0 : i32
    %c0_i32_1 = arith.constant 0 : i32
    return %c0_i32, %c0_i32_0 : i32, i32
  }
  func.func @transform_2(%arg0: i32) -> (i32, i32, i32, i32) {
    %c0_i32 = arith.constant 0 : i32
    %c0_i32_0 = arith.constant 0 : i32
    %c0_i32_1 = arith.constant 0 : i32
    %c0_i32_2 = arith.constant 0 : i32
    return %c0_i32, %arg0, %c0_i32_0, %c0_i32_1 : i32, i32, i32, i32
  }
  func.func @transform_3(%arg0: i32) -> (i32, i32) {
    %c0_i32 = arith.constant 0 : i32
    %c0_i32_0 = arith.constant 0 : i32
    return %c0_i32, %arg0 : i32, i32
  }
}

</mosaic_0001>

<llo_original>
// kernel: aatm_forward.1
$region0: #{aatm_forward.1}
  #allocation0 [shape = 'u32[]', space=smem, size = 0x4, offset = 0x4, fixed_abs, tag = 'smem constant byte address 0x4 - core index']
  #allocation1 [shape = 'u32[144,128]{1,0:T(1,128)}', space=vmem, size = 0x12000, scoped, tag = 'internal scratch']
  %s0 = inlined_call_operand.vmem [shape: f32[2,4,2,64,128], index: 0, kind: input, shape index: {}]
  %s1 = inlined_call_operand.vmem [shape: f32[128,128], index: 1, kind: input, shape index: {}]
  %s2 = inlined_call_operand.vmem [shape: f32[2,4,64,128], index: 2, kind: output, shape index: {0}]
  %s3 = inlined_call_operand.vmem [shape: f32[2,256], index: 3, kind: output, shape index: {1}]
  %4 = xla_tuple %s2, %s3
  %s5 = sld [smem:[#allocation0]]
  $region121: #{aatm_forward.1} parent=0
    _
  %s7 = ssub.s32 1, %s5
  %s8 = scalar_select 0, %s7, %s5
  $region1: #{aatm_forward.1} parent=0
    #allocation2 [shape = 'u8[524288]{0}', space=vmem, size = 0x80000, scoped, tag = 'input window, operand 0']
    #allocation3 [shape = 'u8[262144]{0}', space=vmem, size = 0x40000, scoped, tag = 'output window, operand 0']
    loop: start=0, step=1, limit=4
    $region2: #{aatm_forward.1} parent=1 // loop_pre_header
      _
    $region3: #{aatm_forward.1} parent=1 // loop_header
      %s10 = sphi 0, %s14
      %p11 = scmp.ge.s32.totalorder %s10, 4
      %s20 = sphi 0, %s22
      %s23 = sphi 0, %s20
      %s24 = sphi 0, %s23
      %s40 = sphi 0, %s24
      %s44 = sphi 0, %s44
      %s46 = sphi 0, %s44
      %s47 = sphi 0, %s46
      %s61 = sphi 0, %s47
      %s67 = sphi 0, %s69
      %s70 = sphi 0, %s67
      %s71 = sphi 0, %s70
      %s87 = sphi 0, %s71
      %s93 = sphi 0, %s95
      %s96 = sphi 0, %s93
      %s97 = sphi 0, %s96
      %s113 = sphi 0, %s97
    $region4: #{aatm_forward.1} parent=1 // loop_header_branch
      %13 = sbr.rel (%p11) target = $region8
    $region5: #{aatm_forward.1} parent=1 // loop_body
      %s15 = ssub.s32 %s10, 1
      %s16 = ssub.s32 %s10, 2
      %s17 = sadd.s32 %s10, 1
      %s18 = ssub.s32 %s10, %s17
      %p19 = scmp.eq.s32.totalorder %s18, 0
      %s21 = sadd.s32 %s20, 1
      %s22 = scalar_select %p19, %s20, %s21
      %p25 = pneg %p19
      %p26 = scmp.eq.s32.totalorder %s10, 1
      %p27 = por %p25, %p26
      %p28 = scmp.ne.s32.totalorder %s20, %s23
      %p29 = scmp.eq.s32.totalorder %s10, 0
      %p30 = por %p28, %p29
      %p31 = scmp.ne.s32.totalorder %s20, %s23
      %p32 = scmp.eq.s32.totalorder %s15, 1
      %p33 = por %p31, %p32
      %p34 = scmp.ne.s32.totalorder %s23, %s24
      %p35 = scmp.eq.s32.totalorder %s15, 0
      %p36 = por %p34, %p35
      %p37 = scmp.ne.s32.totalorder %s23, %s24
      %p38 = scmp.eq.s32.totalorder %s16, 1
      %p39 = por %p37, %p38
      %p41 = scmp.ne.s32.totalorder %s24, %s40
      %p42 = scmp.eq.s32.totalorder %s16, 0
      %p43 = por %p41, %p42
      %s45 = sadd.s32 %s44, 1
      %p48 = scmp.eq.s32.totalorder %s10, 1
      %p49 = scmp.ne.s32.totalorder %s44, %s46
      %p50 = scmp.eq.s32.totalorder %s10, 0
      %p51 = por %p49, %p50
      %p52 = scmp.ne.s32.totalorder %s44, %s46
      %p53 = scmp.eq.s32.totalorder %s15, 1
      %p54 = por %p52, %p53
      %p55 = scmp.ne.s32.totalorder %s46, %s47
      %p56 = scmp.eq.s32.totalorder %s15, 0
      %p57 = por %p55, %p56
      %p58 = scmp.ne.s32.totalorder %s46, %s47
      %p59 = scmp.eq.s32.totalorder %s16, 1
      %p60 = por %p58, %p59
      %p62 = scmp.ne.s32.totalorder %s47, %s61
      %p63 = scmp.eq.s32.totalorder %s16, 0
      %p64 = por %p62, %p63
      %s65 = ssub.s32 %s10, %s17
      %p66 = scmp.eq.s32.totalorder %s65, 0
      %s68 = sadd.s32 %s67, 1
      %s69 = scalar_select %p66, %s67, %s68
      %p72 = pneg %p66
      %p73 = scmp.eq.s32.totalorder %s10, 1
      %p74 = por %p72, %p73
      %p75 = scmp.ne.s32.totalorder %s67, %s70
      %p76 = scmp.eq.s32.totalorder %s10, 0
      %p77 = por %p75, %p76
      %p78 = scmp.ne.s32.totalorder %s67, %s70
      %p79 = scmp.eq.s32.totalorder %s15, 1
      %p80 = por %p78, %p79
      %p81 = scmp.ne.s32.totalorder %s70, %s71
      %p82 = scmp.eq.s32.totalorder %s15, 0
      %p83 = por %p81, %p82
      %p84 = scmp.ne.s32.totalorder %s70, %s71
      %p85 = scmp.eq.s32.totalorder %s16, 1
      %p86 = por %p84, %p85
      %p88 = scmp.ne.s32.totalorder %s71, %s87
      %p89 = scmp.eq.s32.totalorder %s16, 0
      %p90 = por %p88, %p89
      %s91 = ssub.s32 %s10, %s17
      %p92 = scmp.eq.s32.totalorder %s91, 0
      %s94 = sadd.s32 %s93, 1
      %s95 = scalar_select %p92, %s93, %s94
      %p98 = pneg %p92
      %p99 = scmp.eq.s32.totalorder %s10, 1
      %p100 = por %p98, %p99
      %p101 = scmp.ne.s32.totalorder %s93, %s96
      %p102 = scmp.eq.s32.totalorder %s10, 0
      %p103 = por %p101, %p102
      %p104 = scmp.ne.s32.totalorder %s93, %s96
      %p105 = scmp.eq.s32.totalorder %s15, 1
      %p106 = por %p104, %p105
      %p107 = scmp.ne.s32.totalorder %s96, %s97
      %p108 = scmp.eq.s32.totalorder %s15, 0
      %p109 = por %p107, %p108
      %p110 = scmp.ne.s32.totalorder %s96, %s97
      %p111 = scmp.eq.s32.totalorder %s16, 1
      %p112 = por %p110, %p111
      %p114 = scmp.ne.s32.totalorder %s97, %s113
      %p115 = scmp.eq.s32.totalorder %s16, 0
      %p116 = por %p114, %p115
      %p117 = scmp.le.s32.totalorder 1, %s10
      %p118 = scmp.lt.s32.totalorder %s10, 3
      %p119 = pnand %p117, %p118
      %p120 = pneg %p119
      // Predicated region
      $region9: #{aatm_forward.1} parent=5 // pred_check
        _
      $region10: #{aatm_forward.1} parent=5 // pred_check_branch
        %122 = sbr.rel (%p119) target = $region12
      $region11: #{aatm_forward.1} parent=5 // pred_region
        %s123 = ssub.s32 %s10, 1
        // Predicated region
        $region13: #{aatm_forward.1} parent=11 // pred_check
          %p124 = pneg %p57
        $region14: #{aatm_forward.1} parent=11 // pred_check_branch
          %126 = sbr.rel (%p124) target = $region16
        $region15: #{aatm_forward.1} parent=11 // pred_region
          _
        $region16: #{aatm_forward.1} parent=11 // pred_fallthru
          _
      $region12: #{aatm_forward.1} parent=5 // pred_fallthru
        _
      %p127 = scmp.lt.s32.totalorder %s10, 2
      // Predicated region
      $region17: #{aatm_forward.1} parent=5 // pred_check
        %p128 = pneg %p127
      $region18: #{aatm_forward.1} parent=5 // pred_check_branch
        %130 = sbr.rel (%p128) target = $region20
      $region19: #{aatm_forward.1} parent=5 // pred_region
        // Predicated region
        $region21: #{aatm_forward.1} parent=19 // pred_check
          %p131 = pneg %p30
        $region22: #{aatm_forward.1} parent=19 // pred_check_branch
          %133 = sbr.rel (%p131) target = $region24
        $region23: #{aatm_forward.1} parent=19 // pred_region
          %s134 = sand.u32 %s20, 1
          %s135 = sand.u32 %s20, 1
          %s136 = smul.addr %s135, 512
          %s137 = scalar_lea.vmem [#allocation2], %s136
          %s138 = smul.u32 2, %s10
          %s139 = smul.addr %s138, 16
          %s140 = smul.addr %s139, 8
          %s141 = scalar_lea.vmem %s0, %s140
          // Predicated region
          $region25: #{aatm_forward.1} parent=23 // pred_check
            _
          $region26: #{aatm_forward.1} parent=23 // pred_check_branch
            %143 = sbr.rel (0) target = $region28
          $region27: #{aatm_forward.1} parent=23 // pred_region
            // Predicated region
            $region29: #{aatm_forward.1} parent=27 // pred_check
              _
            $region30: #{aatm_forward.1} parent=27 // pred_check_branch
              %145 = sbr.rel (0) target = $region32
            $region31: #{aatm_forward.1} parent=27 // pred_region
              // Predicated region
              $region44: #{aatm_forward.1} parent=31 // pred_check
                _
              $region45: #{aatm_forward.1} parent=31 // pred_check_branch
                %286 = sbr.rel (0) target = $region47
              $region46: #{aatm_forward.1} parent=31 // pred_region
                loop: start=0, step=1, limit=1
                $region48: #{aatm_forward.1} parent=46 // loop_pre_header
                  _
                $region49: #{aatm_forward.1} parent=46 // loop_header
                  %s288 = sphi 0, %s292
                  %p289 = scmp.ge.s32.totalorder %s288, 1
                  %s293 = sphi %s141, %s141
                  %s294 = sphi %s137, %s137
                $region50: #{aatm_forward.1} parent=46 // loop_header_branch
                  %291 = sbr.rel (%p289) target = $region54
                $region51: #{aatm_forward.1} parent=46 // loop_body
                  %v295 = vld [vmem:[%s293] sm:$0xff]
                  %296 = vst [vmem:[%s294] sm:$0xff] %v295
                  %v297 = vld [vmem:[%s293 + $0x8] sm:$0xff]
                  %298 = vst [vmem:[%s294 + $0x8] sm:$0xff] %v297
                  %v299 = vld [vmem:[%s293 + $0x10] sm:$0xff]
                  %300 = vst [vmem:[%s294 + $0x10] sm:$0xff] %v299
                  %v301 = vld [vmem:[%s293 + $0x18] sm:$0xff]
                  %302 = vst [vmem:[%s294 + $0x18] sm:$0xff] %v301
                  %v303 = vld [vmem:[%s293 + $0x20] sm:$0xff]
                  %304 = vst [vmem:[%s294 + $0x20] sm:$0xff] %v303
                  %v305 = vld [vmem:[%s293 + $0x28] sm:$0xff]
                  %306 = vst [vmem:[%s294 + $0x28] sm:$0xff] %v305
                  %v307 = vld [vmem:[%s293 + $0x30] sm:$0xff]
                  %308 = vst [vmem:[%s294 + $0x30] sm:$0xff] %v307
                  %v309 = vld [vmem:[%s293 + $0x38] sm:$0xff]
                  %310 = vst [vmem:[%s294 + $0x38] sm:$0xff] %v309
                  %v311 = vld [vmem:[%s293 + $0x40] sm:$0xff]
                  %312 = vst [vmem:[%s294 + $0x40] sm:$0xff] %v311
                  %v313 = vld [vmem:[%s293 + $0x48] sm:$0xff]
                  %314 = vst [vmem:[%s294 + $0x48] sm:$0xff] %v313
                  %v315 = vld [vmem:[%s293 + $0x50] sm:$0xff]
                  %316 = vst [vmem:[%s294 + $0x50] sm:$0xff] %v315
                  %v317 = vld [vmem:[%s293 + $0x58] sm:$0xff]
                  %318 = vst [vmem:[%s294 + $0x58] sm:$0xff] %v317
                  %v319 = vld [vmem:[%s293 + $0x60] sm:$0xff]
                  %320 = vst [vmem:[%s294 + $0x60] sm:$0xff] %v319
                  %v321 = vld [vmem:[%s293 + $0x68] sm:$0xff]
                  %322 = vst [vmem:[%s294 + $0x68] sm:$0xff] %v321
                  %v323 = vld [vmem:[%s293 + $0x70] sm:$0xff]
                  %324 = vst [vmem:[%s294 + $0x70] sm:$0xff] %v323
                  %v325 = vld [vmem:[%s293 + $0x78] sm:$0xff]
                  %326 = vst [vmem:[%s294 + $0x78] sm:$0xff] %v325
                  %v327 = vld [vmem:[%s293 + $0x80] sm:$0xff]
                  %328 = vst [vmem:[%s294 + $0x80] sm:$0xff] %v327
                  %v329 = vld [vmem:[%s293 + $0x88] sm:$0xff]
                  %330 = vst [vmem:[%s294 + $0x88] sm:$0xff] %v329
                  %v331 = vld [vmem:[%s293 + $0x90] sm:$0xff]
                  %332 = vst [vmem:[%s294 + $0x90] sm:$0xff] %v331
                  %v333 = vld [vmem:[%s293 + $0x98] sm:$0xff]
                  %334 = vst [vmem:[%s294 + $0x98] sm:$0xff] %v333
                  %v335 = vld [vmem:[%s293 + $0xa0] sm:$0xff]
                  %336 = vst [vmem:[%s294 + $0xa0] sm:$0xff] %v335
                  %v337 = vld [vmem:[%s293 + $0xa8] sm:$0xff]
                  %338 = vst [vmem:[%s294 + $0xa8] sm:$0xff] %v337
                  %v339 = vld [vmem:[%s293 + $0xb0] sm:$0xff]
                  %340 = vst [vmem:[%s294 + $0xb0] sm:$0xff] %v339
                  %v341 = vld [vmem:[%s293 + $0xb8] sm:$0xff]
                  %342 = vst [vmem:[%s294 + $0xb8] sm:$0xff] %v341
                  %v343 = vld [vmem:[%s293 + $0xc0] sm:$0xff]
                  %344 = vst [vmem:[%s294 + $0xc0] sm:$0xff] %v343
                  %v345 = vld [vmem:[%s293 + $0xc8] sm:$0xff]
                  %346 = vst [vmem:[%s294 + $0xc8] sm:$0xff] %v345
                  %v347 = vld [vmem:[%s293 + $0xd0] sm:$0xff]
                  %348 = vst [vmem:[%s294 + $0xd0] sm:$0xff] %v347
                  %v349 = vld [vmem:[%s293 + $0xd8] sm:$0xff]
                  %350 = vst [vmem:[%s294 + $0xd8] sm:$0xff] %v349
                  %v351 = vld [vmem:[%s293 + $0xe0] sm:$0xff]
                  %352 = vst [vmem:[%s294 + $0xe0] sm:$0xff] %v351
                  %v353 = vld [vmem:[%s293 + $0xe8] sm:$0xff]
                  %354 = vst [vmem:[%s294 + $0xe8] sm:$0xff] %v353
                  %v355 = vld [vmem:[%s293 + $0xf0] sm:$0xff]
                  %356 = vst [vmem:[%s294 + $0xf0] sm:$0xff] %v355
                  %v357 = vld [vmem:[%s293 + $0xf8] sm:$0xff]
                  %358 = vst [vmem:[%s294 + $0xf8] sm:$0xff] %v357
                  %v359 = vld [vmem:[%s293 + $0x200] sm:$0xff]
                  %360 = vst [vmem:[%s294 + $0x100] sm:$0xff] %v359
                  %v361 = vld [vmem:[%s293 + $0x208] sm:$0xff]
                  %362 = vst [vmem:[%s294 + $0x108] sm:$0xff] %v361
                  %v363 = vld [vmem:[%s293 + $0x210] sm:$0xff]
                  %364 = vst [vmem:[%s294 + $0x110] sm:$0xff] %v363
                  %v365 = vld [vmem:[%s293 + $0x218] sm:$0xff]
                  %366 = vst [vmem:[%s294 + $0x118] sm:$0xff] %v365
                  %v367 = vld [vmem:[%s293 + $0x220] sm:$0xff]
                  %368 = vst [vmem:[%s294 + $0x120] sm:$0xff] %v367
                  %v369 = vld [vmem:[%s293 + $0x228] sm:$0xff]
                  %370 = vst [vmem:[%s294 + $0x128] sm:$0xff] %v369
                  %v371 = vld [vmem:[%s293 + $0x230] sm:$0xff]
                  %372 = vst [vmem:[%s294 + $0x130] sm:$0xff] %v371
                  %v373 = vld [vmem:[%s293 + $0x238] sm:$0xff]
                  %374 = vst [vmem:[%s294 + $0x138] sm:$0xff] %v373
                  %v375 = vld [vmem:[%s293 + $0x240] sm:$0xff]
                  %376 = vst [vmem:[%s294 + $0x140] sm:$0xff] %v375
                  %v377 = vld [vmem:[%s293 + $0x248] sm:$0xff]
                  %378 = vst [vmem:[%s294 + $0x148] sm:$0xff] %v377
                  %v379 = vld [vmem:[%s293 + $0x250] sm:$0xff]
                  %380 = vst [vmem:[%s294 + $0x150] sm:$0xff] %v379
                  %v381 = vld [vmem:[%s293 + $0x258] sm:$0xff]
                  %382 = vst [vmem:[%s294 + $0x158] sm:$0xff] %v381
                  %v383 = vld [vmem:[%s293 + $0x260] sm:$0xff]
                  %384 = vst [vmem:[%s294 + $0x160] sm:$0xff] %v383
                  %v385 = vld [vmem:[%s293 + $0x268] sm:$0xff]
                  %386 = vst [vmem:[%s294 + $0x168] sm:$0xff] %v385
                  %v387 = vld [vmem:[%s293 + $0x270] sm:$0xff]
                  %388 = vst [vmem:[%s294 + $0x170] sm:$0xff] %v387
                  %v389 = vld [vmem:[%s293 + $0x278] sm:$0xff]
                  %390 = vst [vmem:[%s294 + $0x178] sm:$0xff] %v389
                  %v391 = vld [vmem:[%s293 + $0x280] sm:$0xff]
                  %392 = vst [vmem:[%s294 + $0x180] sm:$0xff] %v391
                  %v393 = vld [vmem:[%s293 + $0x288] sm:$0xff]
                  %394 = vst [vmem:[%s294 + $0x188] sm:$0xff] %v393
                  %v395 = vld [vmem:[%s293 + $0x290] sm:$0xff]
                  %396 = vst [vmem:[%s294 + $0x190] sm:$0xff] %v395
                  %v397 = vld [vmem:[%s293 + $0x298] sm:$0xff]
                  %398 = vst [vmem:[%s294 + $0x198] sm:$0xff] %v397
                  %v399 = vld [vmem:[%s293 + $0x2a0] sm:$0xff]
                  %400 = vst [vmem:[%s294 + $0x1a0] sm:$0xff] %v399
                  %v401 = vld [vmem:[%s293 + $0x2a8] sm:$0xff]
                  %402 = vst [vmem:[%s294 + $0x1a8] sm:$0xff] %v401
                  %v403 = vld [vmem:[%s293 + $0x2b0] sm:$0xff]
                  %404 = vst [vmem:[%s294 + $0x1b0] sm:$0xff] %v403
                  %v405 = vld [vmem:[%s293 + $0x2b8] sm:$0xff]
                  %406 = vst [vmem:[%s294 + $0x1b8] sm:$0xff] %v405
                  %v407 = vld [vmem:[%s293 + $0x2c0] sm:$0xff]
                  %408 = vst [vmem:[%s294 + $0x1c0] sm:$0xff] %v407
                  %v409 = vld [vmem:[%s293 + $0x2c8] sm:$0xff]
                  %410 = vst [vmem:[%s294 + $0x1c8] sm:$0xff] %v409
                  %v411 = vld [vmem:[%s293 + $0x2d0] sm:$0xff]
                  %412 = vst [vmem:[%s294 + $0x1d0] sm:$0xff] %v411
                  %v413 = vld [vmem:[%s293 + $0x2d8] sm:$0xff]
                  %414 = vst [vmem:[%s294 + $0x1d8] sm:$0xff] %v413
                  %v415 = vld [vmem:[%s293 + $0x2e0] sm:$0xff]
                  %416 = vst [vmem:[%s294 + $0x1e0] sm:$0xff] %v415
                  %v417 = vld [vmem:[%s293 + $0x2e8] sm:$0xff]
                  %418 = vst [vmem:[%s294 + $0x1e8] sm:$0xff] %v417
                  %v419 = vld [vmem:[%s293 + $0x2f0] sm:$0xff]
                  %420 = vst [vmem:[%s294 + $0x1f0] sm:$0xff] %v419
                  %v421 = vld [vmem:[%s293 + $0x2f8] sm:$0xff]
                  %422 = vst [vmem:[%s294 + $0x1f8] sm:$0xff] %v421
                $region52: #{aatm_forward.1} parent=46 // loop_footer
                  %s292 = sadd.s32 1, %s288
                $region53: #{aatm_forward.1} parent=46 // loop_footer_branch
                  %287 = sbr.rel target = $region49
                $region54: #{aatm_forward.1} parent=46 // loop_exit
                  _
              $region47: #{aatm_forward.1} parent=31 // pred_fallthru
                _
              // Predicated region
              $region55: #{aatm_forward.1} parent=31 // pred_check
                _
              $region56: #{aatm_forward.1} parent=31 // pred_check_branch
                %424 = sbr.rel target = $region58
              $region57: #{aatm_forward.1} parent=31 // pred_region
                _
              $region58: #{aatm_forward.1} parent=31 // pred_fallthru
                _
            $region32: #{aatm_forward.1} parent=27 // pred_fallthru
              _
            // Predicated region
            $region33: #{aatm_forward.1} parent=27 // pred_check
              _
            $region34: #{aatm_forward.1} parent=27 // pred_check_branch
              %147 = sbr.rel target = $region36
            $region35: #{aatm_forward.1} parent=27 // pred_region
              loop: start=0, step=1, limit=1
              $region37: #{aatm_forward.1} parent=35 // loop_pre_header
                _
              $region38: #{aatm_forward.1} parent=35 // loop_header
                %s150 = sphi 0, %s154
                %p151 = scmp.ge.s32.totalorder %s150, 1
                %s155 = sphi %s141, %s141
                %s156 = sphi %s137, %s137
              $region39: #{aatm_forward.1} parent=35 // loop_header_branch
                %153 = sbr.rel (%p151) target = $region43
              $region40: #{aatm_forward.1} parent=35 // loop_body
                %v157 = vld [vmem:[%s155] sm:$0xff]
                %158 = vst [vmem:[%s156] sm:$0xff] %v157
                %v159 = vld [vmem:[%s155 + $0x8] sm:$0xff]
                %160 = vst [vmem:[%s156 + $0x8] sm:$0xff] %v159
                %v161 = vld [vmem:[%s155 + $0x10] sm:$0xff]
                %162 = vst [vmem:[%s156 + $0x10] sm:$0xff] %v161
                %v163 = vld [vmem:[%s155 + $0x18] sm:$0xff]
                %164 = vst [vmem:[%s156 + $0x18] sm:$0xff] %v163
                %v165 = vld [vmem:[%s155 + $0x20] sm:$0xff]
                %166 = vst [vmem:[%s156 + $0x20] sm:$0xff] %v165
                %v167 = vld [vmem:[%s155 + $0x28] sm:$0xff]
                %168 = vst [vmem:[%s156 + $0x28] sm:$0xff] %v167
                %v169 = vld [vmem:[%s155 + $0x30] sm:$0xff]
                %170 = vst [vmem:[%s156 + $0x30] sm:$0xff] %v169
                %v171 = vld [vmem:[%s155 + $0x38] sm:$0xff]
                %172 = vst [vmem:[%s156 + $0x38] sm:$0xff] %v171
                %v173 = vld [vmem:[%s155 + $0x40] sm:$0xff]
                %174 = vst [vmem:[%s156 + $0x40] sm:$0xff] %v173
                %v175 = vld [vmem:[%s155 + $0x48] sm:$0xff]
                %176 = vst [vmem:[%s156 + $0x48] sm:$0xff] %v175
                %v177 = vld [vmem:[%s155 + $0x50] sm:$0xff]
                %178 = vst [vmem:[%s156 + $0x50] sm:$0xff] %v177
                %v179 = vld [vmem:[%s155 + $0x58] sm:$0xff]
                %180 = vst [vmem:[%s156 + $0x58] sm:$0xff] %v179
                %v181 = vld [vmem:[%s155 + $0x60] sm:$0xff]
                %182 = vst [vmem:[%s156 + $0x60] sm:$0xff] %v181
                %v183 = vld [vmem:[%s155 + $0x68] sm:$0xff]
                %184 = vst [vmem:[%s156 + $0x68] sm:$0xff] %v183
                %v185 = vld [vmem:[%s155 + $0x70] sm:$0xff]
                %186 = vst [vmem:[%s156 + $0x70] sm:$0xff] %v185
                %v187 = vld [vmem:[%s155 + $0x78] sm:$0xff]
                %188 = vst [vmem:[%s156 + $0x78] sm:$0xff] %v187
                %v189 = vld [vmem:[%s155 + $0x80] sm:$0xff]
                %190 = vst [vmem:[%s156 + $0x80] sm:$0xff] %v189
                %v191 = vld [vmem:[%s155 + $0x88] sm:$0xff]
                %192 = vst [vmem:[%s156 + $0x88] sm:$0xff] %v191
                %v193 = vld [vmem:[%s155 + $0x90] sm:$0xff]
                %194 = vst [vmem:[%s156 + $0x90] sm:$0xff] %v193
                %v195 = vld [vmem:[%s155 + $0x98] sm:$0xff]
                %196 = vst [vmem:[%s156 + $0x98] sm:$0xff] %v195
                %v197 = vld [vmem:[%s155 + $0xa0] sm:$0xff]
                %198 = vst [vmem:[%s156 + $0xa0] sm:$0xff] %v197
                %v199 = vld [vmem:[%s155 + $0xa8] sm:$0xff]
                %200 = vst [vmem:[%s156 + $0xa8] sm:$0xff] %v199
                %v201 = vld [vmem:[%s155 + $0xb0] sm:$0xff]
                %202 = vst [vmem:[%s156 + $0xb0] sm:$0xff] %v201
                %v203 = vld [vmem:[%s155 + $0xb8] sm:$0xff]
                %204 = vst [vmem:[%s156 + $0xb8] sm:$0xff] %v203
                %v205 = vld [vmem:[%s155 + $0xc0] sm:$0xff]
                %206 = vst [vmem:[%s156 + $0xc0] sm:$0xff] %v205
                %v207 = vld [vmem:[%s155 + $0xc8] sm:$0xff]
                %208 = vst [vmem:[%s156 + $0xc8] sm:$0xff] %v207
                %v209 = vld [vmem:[%s155 + $0xd0] sm:$0xff]
                %210 = vst [vmem:[%s156 + $0xd0] sm:$0xff] %v209
                %v211 = vld [vmem:[%s155 + $0xd8] sm:$0xff]
                %212 = vst [vmem:[%s156 + $0xd8] sm:$0xff] %v211
                %v213 = vld [vmem:[%s155 + $0xe0] sm:$0xff]
                %214 = vst [vmem:[%s156 + $0xe0] sm:$0xff] %v213
                %v215 = vld [vmem:[%s155 + $0xe8] sm:$0xff]
                %216 = vst [vmem:[%s156 + $0xe8] sm:$0xff] %v215
                %v217 = vld [vmem:[%s155 + $0xf0] sm:$0xff]
                %218 = vst [vmem:[%s156 + $0xf0] sm:$0xff] %v217
                %v219 = vld [vmem:[%s155 + $0xf8] sm:$0xff]
                %220 = vst [vmem:[%s156 + $0xf8] sm:$0xff] %v219
                %v221 = vld [vmem:[%s155 + $0x200] sm:$0xff]
                %222 = vst [vmem:[%s156 + $0x100] sm:$0xff] %v221
                %v223 = vld [vmem:[%s155 + $0x208] sm:$0xff]
                %224 = vst [vmem:[%s156 + $0x108] sm:$0xff] %v223
                %v225 = vld [vmem:[%s155 + $0x210] sm:$0xff]
                %226 = vst [vmem:[%s156 + $0x110] sm:$0xff] %v225
                %v227 = vld [vmem:[%s155 + $0x218] sm:$0xff]
                %228 = vst [vmem:[%s156 + $0x118] sm:$0xff] %v227
                %v229 = vld [vmem:[%s155 + $0x220] sm:$0xff]
                %230 = vst [vmem:[%s156 + $0x120] sm:$0xff] %v229
                %v231 = vld [vmem:[%s155 + $0x228] sm:$0xff]
                %232 = vst [vmem:[%s156 + $0x128] sm:$0xff] %v231
                %v233 = vld [vmem:[%s155 + $0x230] sm:$0xff]
                %234 = vst [vmem:[%s156 + $0x130] sm:$0xff] %v233
                %v235 = vld [vmem:[%s155 + $0x238] sm:$0xff]
                %236 = vst [vmem:[%s156 + $0x138] sm:$0xff] %v235
                %v237 = vld [vmem:[%s155 + $0x240] sm:$0xff]
                %238 = vst [vmem:[%s156 + $0x140] sm:$0xff] %v237
                %v239 = vld [vmem:[%s155 + $0x248] sm:$0xff]
                %240 = vst [vmem:[%s156 + $0x148] sm:$0xff] %v239
                %v241 = vld [vmem:[%s155 + $0x250] sm:$0xff]
                %242 = vst [vmem:[%s156 + $0x150] sm:$0xff] %v241
                %v243 = vld [vmem:[%s155 + $0x258] sm:$0xff]
                %244 = vst [vmem:[%s156 + $0x158] sm:$0xff] %v243
                %v245 = vld [vmem:[%s155 + $0x260] sm:$0xff]
                %246 = vst [vmem:[%s156 + $0x160] sm:$0xff] %v245
                %v247 = vld [vmem:[%s155 + $0x268] sm:$0xff]
                %248 = vst [vmem:[%s156 + $0x168] sm:$0xff] %v247
                %v249 = vld [vmem:[%s155 + $0x270] sm:$0xff]
                %250 = vst [vmem:[%s156 + $0x170] sm:$0xff] %v249
                %v251 = vld [vmem:[%s155 + $0x278] sm:$0xff]
                %252 = vst [vmem:[%s156 + $0x178] sm:$0xff] %v251
                %v253 = vld [vmem:[%s155 + $0x280] sm:$0xff]
                %254 = vst [vmem:[%s156 + $0x180] sm:$0xff] %v253
                %v255 = vld [vmem:[%s155 + $0x288] sm:$0xff]
                %256 = vst [vmem:[%s156 + $0x188] sm:$0xff] %v255
                %v257 = vld [vmem:[%s155 + $0x290] sm:$0xff]
                %258 = vst [vmem:[%s156 + $0x190] sm:$0xff] %v257
                %v259 = vld [vmem:[%s155 + $0x298] sm:$0xff]
                %260 = vst [vmem:[%s156 + $0x198] sm:$0xff] %v259
                %v261 = vld [vmem:[%s155 + $0x2a0] sm:$0xff]
                %262 = vst [vmem:[%s156 + $0x1a0] sm:$0xff] %v261
                %v263 = vld [vmem:[%s155 + $0x2a8] sm:$0xff]
                %264 = vst [vmem:[%s156 + $0x1a8] sm:$0xff] %v263
                %v265 = vld [vmem:[%s155 + $0x2b0] sm:$0xff]
                %266 = vst [vmem:[%s156 + $0x1b0] sm:$0xff] %v265
                %v267 = vld [vmem:[%s155 + $0x2b8] sm:$0xff]
                %268 = vst [vmem:[%s156 + $0x1b8] sm:$0xff] %v267
                %v269 = vld [vmem:[%s155 + $0x2c0] sm:$0xff]
                %270 = vst [vmem:[%s156 + $0x1c0] sm:$0xff] %v269
                %v271 = vld [vmem:[%s155 + $0x2c8] sm:$0xff]
                %272 = vst [vmem:[%s156 + $0x1c8] sm:$0xff] %v271
                %v273 = vld [vmem:[%s155 + $0x2d0] sm:$0xff]
                %274 = vst [vmem:[%s156 + $0x1d0] sm:$0xff] %v273
                %v275 = vld [vmem:[%s155 + $0x2d8] sm:$0xff]
                %276 = vst [vmem:[%s156 + $0x1d8] sm:$0xff] %v275
                %v277 = vld [vmem:[%s155 + $0x2e0] sm:$0xff]
                %278 = vst [vmem:[%s156 + $0x1e0] sm:$0xff] %v277
                %v279 = vld [vmem:[%s155 + $0x2e8] sm:$0xff]
                %280 = vst [vmem:[%s156 + $0x1e8] sm:$0xff] %v279
                %v281 = vld [vmem:[%s155 + $0x2f0] sm:$0xff]
                %282 = vst [vmem:[%s156 + $0x1f0] sm:$0xff] %v281
                %v283 = vld [vmem:[%s155 + $0x2f8] sm:$0xff]
                %284 = vst [vmem:[%s156 + $0x1f8] sm:$0xff] %v283
              $region41: #{aatm_forward.1} parent=35 // loop_footer
                %s154 = sadd.s32 1, %s150
              $region42: #{aatm_forward.1} parent=35 // loop_footer_branch
                %149 = sbr.rel target = $region38
              $region43: #{aatm_forward.1} parent=35 // loop_exit
                _
            $region36: #{aatm_forward.1} parent=27 // pred_fallthru
              _
          $region28: #{aatm_forward.1} parent=23 // pred_fallthru
            _
          %425 = vnop
        $region24: #{aatm_forward.1} parent=19 // pred_fallthru
          _
      $region20: #{aatm_forward.1} parent=5 // pred_fallthru
        _
      %p426 = scmp.le.s32.totalorder 1, %s10
      %p427 = scmp.lt.s32.totalorder %s10, 3
      %p428 = pnand %p426, %p427
      %p429 = pneg %p428
      // Predicated region
      $region59: #{aatm_forward.1} parent=5 // pred_check
        _
      $region60: #{aatm_forward.1} parent=5 // pred_check_branch
        %431 = sbr.rel (%p428) target = $region62
      $region61: #{aatm_forward.1} parent=5 // pred_region
        %s432 = ssub.s32 %s10, 1
        %s433 = sand.u32 %s23, 1
        %s434 = sand.u32 %s23, 1
        %s435 = smul.addr %s434, 512
        %s436 = scalar_lea.vmem [#allocation2], %s435
        // Predicated region
        $region63: #{aatm_forward.1} parent=61 // pred_check
          %p437 = pneg %p36
        $region64: #{aatm_forward.1} parent=61 // pred_check_branch
          %439 = sbr.rel (%p437) target = $region66
        $region65: #{aatm_forward.1} parent=61 // pred_region
          _
        $region66: #{aatm_forward.1} parent=61 // pred_fallthru
          _
        %s440 = sand.u32 %s23, 1
        %s441 = sand.u32 %s23, 1
        %s442 = smul.addr %s441, 512
        %s443 = scalar_lea.vmem [#allocation2], %s442
        %p444 = pneg %p36
        %p445 = pneg %p33
        %p446 = pneg %p57
        %p447 = pneg %p54
        %p448 = pneg %p83
        %p449 = pneg %p80
        %s450 = sand.u32 %s70, 1
        %s451 = sand.u32 %s70, 1
        %s452 = smul.addr %s451, 256
        %s453 = scalar_lea.vmem [#allocation3], %s452
        %p454 = pneg %p109
        %p455 = pneg %p106
        %p456 = scmp.lt.s32.totalorder %s15, 1
        %s457 = scalar_select %p456, %s15, 1
        %s458 = smul.addr %s457, 2
        %s459 = scalar_lea.vmem %s3, %s458
        %s460 = smul.u32 2, %s15
        %s461 = smul.u32 2, %s15
        %p462 = scmp.lt.s32.totalorder %s15, 1
        %s463 = scalar_select %p462, %s15, 1
        %s464 = smul.addr %s463, 2
        %s465 = scalar_lea.vmem %s3, %s464
        %v466 = vld [vmem:[%s436] sm:$0xff]
        %v467 = vld [vmem:[%s436 + $0x8] sm:$0xff]
        %v468 = vld [vmem:[%s436 + $0x10] sm:$0xff]
        %v469 = vld [vmem:[%s436 + $0x18] sm:$0xff]
        %v470 = vld [vmem:[%s436 + $0x20] sm:$0xff]
        %v471 = vld [vmem:[%s436 + $0x28] sm:$0xff]
        %v472 = vld [vmem:[%s436 + $0x30] sm:$0xff]
        %v473 = vld [vmem:[%s436 + $0x38] sm:$0xff]
        %v474 = vld [vmem:[%s436 + $0x80] sm:$0xff]
        %v475 = vld [vmem:[%s436 + $0x88] sm:$0xff]
        %v476 = vld [vmem:[%s436 + $0x90] sm:$0xff]
        %v477 = vld [vmem:[%s436 + $0x98] sm:$0xff]
        %v478 = vld [vmem:[%s436 + $0xa0] sm:$0xff]
        %v479 = vld [vmem:[%s436 + $0xa8] sm:$0xff]
        %v480 = vld [vmem:[%s436 + $0xb0] sm:$0xff]
        %v481 = vld [vmem:[%s436 + $0xb8] sm:$0xff]
        %v482 = vld [vmem:[%s436 + $0x100] sm:$0xff]
        %v483 = vld [vmem:[%s436 + $0x108] sm:$0xff]
        %v484 = vld [vmem:[%s436 + $0x110] sm:$0xff]
        %v485 = vld [vmem:[%s436 + $0x118] sm:$0xff]
        %v486 = vld [vmem:[%s436 + $0x120] sm:$0xff]
        %v487 = vld [vmem:[%s436 + $0x128] sm:$0xff]
        %v488 = vld [vmem:[%s436 + $0x130] sm:$0xff]
        %v489 = vld [vmem:[%s436 + $0x138] sm:$0xff]
        %v490 = vld [vmem:[%s436 + $0x180] sm:$0xff]
        %v491 = vld [vmem:[%s436 + $0x188] sm:$0xff]
        %v492 = vld [vmem:[%s436 + $0x190] sm:$0xff]
        %v493 = vld [vmem:[%s436 + $0x198] sm:$0xff]
        %v494 = vld [vmem:[%s436 + $0x1a0] sm:$0xff]
        %v495 = vld [vmem:[%s436 + $0x1a8] sm:$0xff]
        %v496 = vld [vmem:[%s436 + $0x1b0] sm:$0xff]
        %v497 = vld [vmem:[%s436 + $0x1b8] sm:$0xff]
        %s498 = scalar_lea.vmem %s436, 64 [#allocation2]
        %v499 = vld [vmem:[%s498] sm:$0xff]
        %v500 = vld [vmem:[%s498 + $0x8] sm:$0xff]
        %v501 = vld [vmem:[%s498 + $0x10] sm:$0xff]
        %v502 = vld [vmem:[%s498 + $0x18] sm:$0xff]
        %v503 = vld [vmem:[%s498 + $0x20] sm:$0xff]
        %v504 = vld [vmem:[%s498 + $0x28] sm:$0xff]
        %v505 = vld [vmem:[%s498 + $0x30] sm:$0xff]
        %v506 = vld [vmem:[%s498 + $0x38] sm:$0xff]
        %v507 = vld [vmem:[%s498 + $0x80] sm:$0xff]
        %v508 = vld [vmem:[%s498 + $0x88] sm:$0xff]
        %v509 = vld [vmem:[%s498 + $0x90] sm:$0xff]
        %v510 = vld [vmem:[%s498 + $0x98] sm:$0xff]
        %v511 = vld [vmem:[%s498 + $0xa0] sm:$0xff]
        %v512 = vld [vmem:[%s498 + $0xa8] sm:$0xff]
        %v513 = vld [vmem:[%s498 + $0xb0] sm:$0xff]
        %v514 = vld [vmem:[%s498 + $0xb8] sm:$0xff]
        %v515 = vld [vmem:[%s498 + $0x100] sm:$0xff]
        %v516 = vld [vmem:[%s498 + $0x108] sm:$0xff]
        %v517 = vld [vmem:[%s498 + $0x110] sm:$0xff]
        %v518 = vld [vmem:[%s498 + $0x118] sm:$0xff]
        %v519 = vld [vmem:[%s498 + $0x120] sm:$0xff]
        %v520 = vld [vmem:[%s498 + $0x128] sm:$0xff]
        %v521 = vld [vmem:[%s498 + $0x130] sm:$0xff]
        %v522 = vld [vmem:[%s498 + $0x138] sm:$0xff]
        %v523 = vld [vmem:[%s498 + $0x180] sm:$0xff]
        %v524 = vld [vmem:[%s498 + $0x188] sm:$0xff]
        %v525 = vld [vmem:[%s498 + $0x190] sm:$0xff]
        %v526 = vld [vmem:[%s498 + $0x198] sm:$0xff]
        %v527 = vld [vmem:[%s498 + $0x1a0] sm:$0xff]
        %v528 = vld [vmem:[%s498 + $0x1a8] sm:$0xff]
        %v529 = vld [vmem:[%s498 + $0x1b0] sm:$0xff]
        %v530 = vld [vmem:[%s498 + $0x1b8] sm:$0xff]
        %531 = vadd.xlane.f32.xlu0 %v466
        %v532 = vpop.xlane.xlu0 %531
        %533 = vadd.xlane.f32.xlu0 %v467
        %v534 = vpop.xlane.xlu0 %533
        %535 = vadd.xlane.f32.xlu0 %v468
        %v536 = vpop.xlane.xlu0 %535
        %537 = vadd.xlane.f32.xlu0 %v469
        %v538 = vpop.xlane.xlu0 %537
        %539 = vadd.xlane.f32.xlu0 %v470
        %v540 = vpop.xlane.xlu0 %539
        %541 = vadd.xlane.f32.xlu0 %v471
        %v542 = vpop.xlane.xlu0 %541
        %543 = vadd.xlane.f32.xlu0 %v472
        %v544 = vpop.xlane.xlu0 %543
        %545 = vadd.xlane.f32.xlu0 %v473
        %v546 = vpop.xlane.xlu0 %545
        %547 = vadd.xlane.f32.xlu0 %v474
        %v548 = vpop.xlane.xlu0 %547
        %549 = vadd.xlane.f32.xlu0 %v475
        %v550 = vpop.xlane.xlu0 %549
        %551 = vadd.xlane.f32.xlu0 %v476
        %v552 = vpop.xlane.xlu0 %551
        %553 = vadd.xlane.f32.xlu0 %v477
        %v554 = vpop.xlane.xlu0 %553
        %555 = vadd.xlane.f32.xlu0 %v478
        %v556 = vpop.xlane.xlu0 %555
        %557 = vadd.xlane.f32.xlu0 %v479
        %v558 = vpop.xlane.xlu0 %557
        %559 = vadd.xlane.f32.xlu0 %v480
        %v560 = vpop.xlane.xlu0 %559
        %561 = vadd.xlane.f32.xlu0 %v481
        %v562 = vpop.xlane.xlu0 %561
        %563 = vadd.xlane.f32.xlu0 %v482
        %v564 = vpop.xlane.xlu0 %563
        %565 = vadd.xlane.f32.xlu0 %v483
        %v566 = vpop.xlane.xlu0 %565
        %567 = vadd.xlane.f32.xlu0 %v484
        %v568 = vpop.xlane.xlu0 %567
        %569 = vadd.xlane.f32.xlu0 %v485
        %v570 = vpop.xlane.xlu0 %569
        %571 = vadd.xlane.f32.xlu0 %v486
        %v572 = vpop.xlane.xlu0 %571
        %573 = vadd.xlane.f32.xlu0 %v487
        %v574 = vpop.xlane.xlu0 %573
        %575 = vadd.xlane.f32.xlu0 %v488
        %v576 = vpop.xlane.xlu0 %575
        %577 = vadd.xlane.f32.xlu0 %v489
        %v578 = vpop.xlane.xlu0 %577
        %579 = vadd.xlane.f32.xlu0 %v490
        %v580 = vpop.xlane.xlu0 %579
        %581 = vadd.xlane.f32.xlu0 %v491
        %v582 = vpop.xlane.xlu0 %581
        %583 = vadd.xlane.f32.xlu0 %v492
        %v584 = vpop.xlane.xlu0 %583
        %585 = vadd.xlane.f32.xlu0 %v493
        %v586 = vpop.xlane.xlu0 %585
        %587 = vadd.xlane.f32.xlu0 %v494
        %v588 = vpop.xlane.xlu0 %587
        %589 = vadd.xlane.f32.xlu0 %v495
        %v590 = vpop.xlane.xlu0 %589
        %591 = vadd.xlane.f32.xlu0 %v496
        %v592 = vpop.xlane.xlu0 %591
        %593 = vadd.xlane.f32.xlu0 %v497
        %v594 = vpop.xlane.xlu0 %593
        %v595 = vmul.f32 %v532, 0.0078125
        %v596 = vmul.f32 %v534, 0.0078125
        %v597 = vmul.f32 %v536, 0.0078125
        %v598 = vmul.f32 %v538, 0.0078125
        %v599 = vmul.f32 %v540, 0.0078125
        %v600 = vmul.f32 %v542, 0.0078125
        %v601 = vmul.f32 %v544, 0.0078125
        %v602 = vmul.f32 %v546, 0.0078125
        %v603 = vmul.f32 %v548, 0.0078125
        %v604 = vmul.f32 %v550, 0.0078125
        %v605 = vmul.f32 %v552, 0.0078125
        %v606 = vmul.f32 %v554, 0.0078125
        %v607 = vmul.f32 %v556, 0.0078125
        %v608 = vmul.f32 %v558, 0.0078125
        %v609 = vmul.f32 %v560, 0.0078125
        %v610 = vmul.f32 %v562, 0.0078125
        %v611 = vmul.f32 %v564, 0.0078125
        %v612 = vmul.f32 %v566, 0.0078125
        %v613 = vmul.f32 %v568, 0.0078125
        %v614 = vmul.f32 %v570, 0.0078125
        %v615 = vmul.f32 %v572, 0.0078125
        %v616 = vmul.f32 %v574, 0.0078125
        %v617 = vmul.f32 %v576, 0.0078125
        %v618 = vmul.f32 %v578, 0.0078125
        %v619 = vmul.f32 %v580, 0.0078125
        %v620 = vmul.f32 %v582, 0.0078125
        %v621 = vmul.f32 %v584, 0.0078125
        %v622 = vmul.f32 %v586, 0.0078125
        %v623 = vmul.f32 %v588, 0.0078125
        %v624 = vmul.f32 %v590, 0.0078125
        %v625 = vmul.f32 %v592, 0.0078125
        %v626 = vmul.f32 %v594, 0.0078125
        %627 = vadd.xlane.f32.xlu0 %v499
        %v628 = vpop.xlane.xlu0 %627
        %629 = vadd.xlane.f32.xlu0 %v500
        %v630 = vpop.xlane.xlu0 %629
        %631 = vadd.xlane.f32.xlu0 %v501
        %v632 = vpop.xlane.xlu0 %631
        %633 = vadd.xlane.f32.xlu0 %v502
        %v634 = vpop.xlane.xlu0 %633
        %635 = vadd.xlane.f32.xlu0 %v503
        %v636 = vpop.xlane.xlu0 %635
        %637 = vadd.xlane.f32.xlu0 %v504
        %v638 = vpop.xlane.xlu0 %637
        %639 = vadd.xlane.f32.xlu0 %v505
        %v640 = vpop.xlane.xlu0 %639
        %641 = vadd.xlane.f32.xlu0 %v506
        %v642 = vpop.xlane.xlu0 %641
        %643 = vadd.xlane.f32.xlu0 %v507
        %v644 = vpop.xlane.xlu0 %643
        %645 = vadd.xlane.f32.xlu0 %v508
        %v646 = vpop.xlane.xlu0 %645
        %647 = vadd.xlane.f32.xlu0 %v509
        %v648 = vpop.xlane.xlu0 %647
        %649 = vadd.xlane.f32.xlu0 %v510
        %v650 = vpop.xlane.xlu0 %649
        %651 = vadd.xlane.f32.xlu0 %v511
        %v652 = vpop.xlane.xlu0 %651
        %653 = vadd.xlane.f32.xlu0 %v512
        %v654 = vpop.xlane.xlu0 %653
        %655 = vadd.xlane.f32.xlu0 %v513
        %v656 = vpop.xlane.xlu0 %655
        %657 = vadd.xlane.f32.xlu0 %v514
        %v658 = vpop.xlane.xlu0 %657
        %659 = vadd.xlane.f32.xlu0 %v515
        %v660 = vpop.xlane.xlu0 %659
        %661 = vadd.xlane.f32.xlu0 %v516
        %v662 = vpop.xlane.xlu0 %661
        %663 = vadd.xlane.f32.xlu0 %v517
        %v664 = vpop.xlane.xlu0 %663
        %665 = vadd.xlane.f32.xlu0 %v518
        %v666 = vpop.xlane.xlu0 %665
        %667 = vadd.xlane.f32.xlu0 %v519
        %v668 = vpop.xlane.xlu0 %667
        %669 = vadd.xlane.f32.xlu0 %v520
        %v670 = vpop.xlane.xlu0 %669
        %671 = vadd.xlane.f32.xlu0 %v521
        %v672 = vpop.xlane.xlu0 %671
        %673 = vadd.xlane.f32.xlu0 %v522
        %v674 = vpop.xlane.xlu0 %673
        %675 = vadd.xlane.f32.xlu0 %v523
        %v676 = vpop.xlane.xlu0 %675
        %677 = vadd.xlane.f32.xlu0 %v524
        %v678 = vpop.xlane.xlu0 %677
        %679 = vadd.xlane.f32.xlu0 %v525
        %v680 = vpop.xlane.xlu0 %679
        %681 = vadd.xlane.f32.xlu0 %v526
        %v682 = vpop.xlane.xlu0 %681
        %683 = vadd.xlane.f32.xlu0 %v527
        %v684 = vpop.xlane.xlu0 %683
        %685 = vadd.xlane.f32.xlu0 %v528
        %v686 = vpop.xlane.xlu0 %685
        %687 = vadd.xlane.f32.xlu0 %v529
        %v688 = vpop.xlane.xlu0 %687
        %689 = vadd.xlane.f32.xlu0 %v530
        %v690 = vpop.xlane.xlu0 %689
        %v691 = vmul.f32 %v628, 0.0078125
        %v692 = vmul.f32 %v630, 0.0078125
        %v693 = vmul.f32 %v632, 0.0078125
        %v694 = vmul.f32 %v634, 0.0078125
        %v695 = vmul.f32 %v636, 0.0078125
        %v696 = vmul.f32 %v638, 0.0078125
        %v697 = vmul.f32 %v640, 0.0078125
        %v698 = vmul.f32 %v642, 0.0078125
        %v699 = vmul.f32 %v644, 0.0078125
        %v700 = vmul.f32 %v646, 0.0078125
        %v701 = vmul.f32 %v648, 0.0078125
        %v702 = vmul.f32 %v650, 0.0078125
        %v703 = vmul.f32 %v652, 0.0078125
        %v704 = vmul.f32 %v654, 0.0078125
        %v705 = vmul.f32 %v656, 0.0078125
        %v706 = vmul.f32 %v658, 0.0078125
        %v707 = vmul.f32 %v660, 0.0078125
        %v708 = vmul.f32 %v662, 0.0078125
        %v709 = vmul.f32 %v664, 0.0078125
        %v710 = vmul.f32 %v666, 0.0078125
        %v711 = vmul.f32 %v668, 0.0078125
        %v712 = vmul.f32 %v670, 0.0078125
        %v713 = vmul.f32 %v672, 0.0078125
        %v714 = vmul.f32 %v674, 0.0078125
        %v715 = vmul.f32 %v676, 0.0078125
        %v716 = vmul.f32 %v678, 0.0078125
        %v717 = vmul.f32 %v680, 0.0078125
        %v718 = vmul.f32 %v682, 0.0078125
        %v719 = vmul.f32 %v684, 0.0078125
        %v720 = vmul.f32 %v686, 0.0078125
        %v721 = vmul.f32 %v688, 0.0078125
        %v722 = vmul.f32 %v690, 0.0078125
        %v755 = vlaneseq
        %v756 = vand.u32 %v755, 127
        %v757 = vlaneseq
        %v758 = vshrl.u32 %v757, 7
        %v759 = vsub.s32 %v756, %v758
        %v760 = vrot.slane %v595, %v759
        %v761 = vadd.s32 %v756, 4294967288
        %v762 = vlaneseq
        %v763 = vshrl.u32 %v762, 7
        %v764 = vsub.s32 %v761, %v763
        %v765 = vrot.slane %v596, %v764
        %vm766 = vcmask 130112
        %v767 = vsel %vm766, %v765, %v760
        %v768 = vadd.s32 %v756, 4294967280
        %v769 = vlaneseq
        %v770 = vshrl.u32 %v769, 7
        %v771 = vsub.s32 %v768, %v770
        %v772 = vrot.slane %v597, %v771
        %vm773 = vcmask 195712
        %v774 = vsel %vm773, %v772, %v767
        %v775 = vadd.s32 %v756, 4294967272
        %v776 = vlaneseq
        %v777 = vshrl.u32 %v776, 7
        %v778 = vsub.s32 %v775, %v777
        %v779 = vrot.slane %v598, %v778
        %vm780 = vcmask 261312
        %v781 = vsel %vm780, %v779, %v774
        %v782 = vadd.s32 %v756, 4294967264
        %v783 = vlaneseq
        %v784 = vshrl.u32 %v783, 7
        %v785 = vsub.s32 %v782, %v784
        %v786 = vrot.slane %v599, %v785
        %vm787 = vcmask 326912
        %v788 = vsel %vm787, %v786, %v781
        %v789 = vadd.s32 %v756, 4294967256
        %v790 = vlaneseq
        %v791 = vshrl.u32 %v790, 7
        %v792 = vsub.s32 %v789, %v791
        %v793 = vrot.slane %v600, %v792
        %vm794 = vcmask 392512
        %v795 = vsel %vm794, %v793, %v788
        %v796 = vadd.s32 %v756, 4294967248
        %v797 = vlaneseq
        %v798 = vshrl.u32 %v797, 7
        %v799 = vsub.s32 %v796, %v798
        %v800 = vrot.slane %v601, %v799
        %vm801 = vcmask 458112
        %v802 = vsel %vm801, %v800, %v795
        %v803 = vadd.s32 %v756, 4294967240
        %v804 = vlaneseq
        %v805 = vshrl.u32 %v804, 7
        %v806 = vsub.s32 %v803, %v805
        %v807 = vrot.slane %v602, %v806
        %vm808 = vcmask 523712
        %v809 = vsel %vm808, %v807, %v802
        %v810 = vlaneseq
        %v811 = vshrl.u32 %v810, 7
        %v812 = vsub.s32 %v756, %v811
        %v813 = vrot.slane %v603, %v812
        %v814 = vlaneseq
        %v815 = vshrl.u32 %v814, 7
        %v816 = vsub.s32 %v761, %v815
        %v817 = vrot.slane %v604, %v816
        %v818 = vsel %vm766, %v817, %v813
        %v819 = vlaneseq
        %v820 = vshrl.u32 %v819, 7
        %v821 = vsub.s32 %v768, %v820
        %v822 = vrot.slane %v605, %v821
        %v823 = vsel %vm773, %v822, %v818
        %v824 = vlaneseq
        %v825 = vshrl.u32 %v824, 7
        %v826 = vsub.s32 %v775, %v825
        %v827 = vrot.slane %v606, %v826
        %v828 = vsel %vm780, %v827, %v823
        %v829 = vlaneseq
        %v830 = vshrl.u32 %v829, 7
        %v831 = vsub.s32 %v782, %v830
        %v832 = vrot.slane %v607, %v831
        %v833 = vsel %vm787, %v832, %v828
        %v834 = vlaneseq
        %v835 = vshrl.u32 %v834, 7
        %v836 = vsub.s32 %v789, %v835
        %v837 = vrot.slane %v608, %v836
        %v838 = vsel %vm794, %v837, %v833
        %v839 = vlaneseq
        %v840 = vshrl.u32 %v839, 7
        %v841 = vsub.s32 %v796, %v840
        %v842 = vrot.slane %v609, %v841
        %v843 = vsel %vm801, %v842, %v838
        %v844 = vlaneseq
        %v845 = vshrl.u32 %v844, 7
        %v846 = vsub.s32 %v803, %v845
        %v847 = vrot.slane %v610, %v846
        %v848 = vsel %vm808, %v847, %v843
        %v849 = vlaneseq
        %v850 = vshrl.u32 %v849, 7
        %v851 = vsub.s32 %v756, %v850
        %v852 = vrot.slane %v611, %v851
        %v853 = vlaneseq
        %v854 = vshrl.u32 %v853, 7
        %v855 = vsub.s32 %v761, %v854
        %v856 = vrot.slane %v612, %v855
        %v857 = vsel %vm766, %v856, %v852
        %v858 = vlaneseq
        %v859 = vshrl.u32 %v858, 7
        %v860 = vsub.s32 %v768, %v859
        %v861 = vrot.slane %v613, %v860
        %v862 = vsel %vm773, %v861, %v857
        %v863 = vlaneseq
        %v864 = vshrl.u32 %v863, 7
        %v865 = vsub.s32 %v775, %v864
        %v866 = vrot.slane %v614, %v865
        %v867 = vsel %vm780, %v866, %v862
        %v868 = vlaneseq
        %v869 = vshrl.u32 %v868, 7
        %v870 = vsub.s32 %v782, %v869
        %v871 = vrot.slane %v615, %v870
        %v872 = vsel %vm787, %v871, %v867
        %v873 = vlaneseq
        %v874 = vshrl.u32 %v873, 7
        %v875 = vsub.s32 %v789, %v874
        %v876 = vrot.slane %v616, %v875
        %v877 = vsel %vm794, %v876, %v872
        %v878 = vlaneseq
        %v879 = vshrl.u32 %v878, 7
        %v880 = vsub.s32 %v796, %v879
        %v881 = vrot.slane %v617, %v880
        %v882 = vsel %vm801, %v881, %v877
        %v883 = vlaneseq
        %v884 = vshrl.u32 %v883, 7
        %v885 = vsub.s32 %v803, %v884
        %v886 = vrot.slane %v618, %v885
        %v887 = vsel %vm808, %v886, %v882
        %v888 = vlaneseq
        %v889 = vshrl.u32 %v888, 7
        %v890 = vsub.s32 %v756, %v889
        %v891 = vrot.slane %v619, %v890
        %v892 = vlaneseq
        %v893 = vshrl.u32 %v892, 7
        %v894 = vsub.s32 %v761, %v893
        %v895 = vrot.slane %v620, %v894
        %v896 = vsel %vm766, %v895, %v891
        %v897 = vlaneseq
        %v898 = vshrl.u32 %v897, 7
        %v899 = vsub.s32 %v768, %v898
        %v900 = vrot.slane %v621, %v899
        %v901 = vsel %vm773, %v900, %v896
        %v902 = vlaneseq
        %v903 = vshrl.u32 %v902, 7
        %v904 = vsub.s32 %v775, %v903
        %v905 = vrot.slane %v622, %v904
        %v906 = vsel %vm780, %v905, %v901
        %v907 = vlaneseq
        %v908 = vshrl.u32 %v907, 7
        %v909 = vsub.s32 %v782, %v908
        %v910 = vrot.slane %v623, %v909
        %v911 = vsel %vm787, %v910, %v906
        %v912 = vlaneseq
        %v913 = vshrl.u32 %v912, 7
        %v914 = vsub.s32 %v789, %v913
        %v915 = vrot.slane %v624, %v914
        %v916 = vsel %vm794, %v915, %v911
        %v917 = vlaneseq
        %v918 = vshrl.u32 %v917, 7
        %v919 = vsub.s32 %v796, %v918
        %v920 = vrot.slane %v625, %v919
        %v921 = vsel %vm801, %v920, %v916
        %v922 = vlaneseq
        %v923 = vshrl.u32 %v922, 7
        %v924 = vsub.s32 %v803, %v923
        %v925 = vrot.slane %v626, %v924
        %v926 = vsel %vm808, %v925, %v921
        %vm927 = vcmask 1041409
        %v928 = vsel %vm927, %v848, %v809
        %vm929 = vcmask 1042434
        %v930 = vsel %vm929, %v887, %v928
        %vm931 = vcmask 1043459
        %v932 = vsel %vm931, %v926, %v930
        %v966 = vlaneseq
        %v967 = vshrl.u32 %v966, 7
        %v968 = vsub.s32 %v756, %v967
        %v969 = vrot.slane %v691, %v968
        %v970 = vlaneseq
        %v971 = vshrl.u32 %v970, 7
        %v972 = vsub.s32 %v761, %v971
        %v973 = vrot.slane %v692, %v972
        %v974 = vsel %vm766, %v973, %v969
        %v975 = vlaneseq
        %v976 = vshrl.u32 %v975, 7
        %v977 = vsub.s32 %v768, %v976
        %v978 = vrot.slane %v693, %v977
        %v979 = vsel %vm773, %v978, %v974
        %v980 = vlaneseq
        %v981 = vshrl.u32 %v980, 7
        %v982 = vsub.s32 %v775, %v981
        %v983 = vrot.slane %v694, %v982
        %v984 = vsel %vm780, %v983, %v979
        %v985 = vlaneseq
        %v986 = vshrl.u32 %v985, 7
        %v987 = vsub.s32 %v782, %v986
        %v988 = vrot.slane %v695, %v987
        %v989 = vsel %vm787, %v988, %v984
        %v990 = vlaneseq
        %v991 = vshrl.u32 %v990, 7
        %v992 = vsub.s32 %v789, %v991
        %v993 = vrot.slane %v696, %v992
        %v994 = vsel %vm794, %v993, %v989
        %v995 = vlaneseq
        %v996 = vshrl.u32 %v995, 7
        %v997 = vsub.s32 %v796, %v996
        %v998 = vrot.slane %v697, %v997
        %v999 = vsel %vm801, %v998, %v994
        %v1000 = vlaneseq
        %v1001 = vshrl.u32 %v1000, 7
        %v1002 = vsub.s32 %v803, %v1001
        %v1003 = vrot.slane %v698, %v1002
        %v1004 = vsel %vm808, %v1003, %v999
        %v1005 = vlaneseq
        %v1006 = vshrl.u32 %v1005, 7
        %v1007 = vsub.s32 %v756, %v1006
        %v1008 = vrot.slane %v699, %v1007
        %v1009 = vlaneseq
        %v1010 = vshrl.u32 %v1009, 7
        %v1011 = vsub.s32 %v761, %v1010
        %v1012 = vrot.slane %v700, %v1011
        %v1013 = vsel %vm766, %v1012, %v1008
        %v1014 = vlaneseq
        %v1015 = vshrl.u32 %v1014, 7
        %v1016 = vsub.s32 %v768, %v1015
        %v1017 = vrot.slane %v701, %v1016
        %v1018 = vsel %vm773, %v1017, %v1013
        %v1019 = vlaneseq
        %v1020 = vshrl.u32 %v1019, 7
        %v1021 = vsub.s32 %v775, %v1020
        %v1022 = vrot.slane %v702, %v1021
        %v1023 = vsel %vm780, %v1022, %v1018
        %v1024 = vlaneseq
        %v1025 = vshrl.u32 %v1024, 7
        %v1026 = vsub.s32 %v782, %v1025
        %v1027 = vrot.slane %v703, %v1026
        %v1028 = vsel %vm787, %v1027, %v1023
        %v1029 = vlaneseq
        %v1030 = vshrl.u32 %v1029, 7
        %v1031 = vsub.s32 %v789, %v1030
        %v1032 = vrot.slane %v704, %v1031
        %v1033 = vsel %vm794, %v1032, %v1028
        %v1034 = vlaneseq
        %v1035 = vshrl.u32 %v1034, 7
        %v1036 = vsub.s32 %v796, %v1035
        %v1037 = vrot.slane %v705, %v1036
        %v1038 = vsel %vm801, %v1037, %v1033
        %v1039 = vlaneseq
        %v1040 = vshrl.u32 %v1039, 7
        %v1041 = vsub.s32 %v803, %v1040
        %v1042 = vrot.slane %v706, %v1041
        %v1043 = vsel %vm808, %v1042, %v1038
        %v1044 = vlaneseq
        %v1045 = vshrl.u32 %v1044, 7
        %v1046 = vsub.s32 %v756, %v1045
        %v1047 = vrot.slane %v707, %v1046
        %v1048 = vlaneseq
        %v1049 = vshrl.u32 %v1048, 7
        %v1050 = vsub.s32 %v761, %v1049
        %v1051 = vrot.slane %v708, %v1050
        %v1052 = vsel %vm766, %v1051, %v1047
        %v1053 = vlaneseq
        %v1054 = vshrl.u32 %v1053, 7
        %v1055 = vsub.s32 %v768, %v1054
        %v1056 = vrot.slane %v709, %v1055
        %v1057 = vsel %vm773, %v1056, %v1052
        %v1058 = vlaneseq
        %v1059 = vshrl.u32 %v1058, 7
        %v1060 = vsub.s32 %v775, %v1059
        %v1061 = vrot.slane %v710, %v1060
        %v1062 = vsel %vm780, %v1061, %v1057
        %v1063 = vlaneseq
        %v1064 = vshrl.u32 %v1063, 7
        %v1065 = vsub.s32 %v782, %v1064
        %v1066 = vrot.slane %v711, %v1065
        %v1067 = vsel %vm787, %v1066, %v1062
        %v1068 = vlaneseq
        %v1069 = vshrl.u32 %v1068, 7
        %v1070 = vsub.s32 %v789, %v1069
        %v1071 = vrot.slane %v712, %v1070
        %v1072 = vsel %vm794, %v1071, %v1067
        %v1073 = vlaneseq
        %v1074 = vshrl.u32 %v1073, 7
        %v1075 = vsub.s32 %v796, %v1074
        %v1076 = vrot.slane %v713, %v1075
        %v1077 = vsel %vm801, %v1076, %v1072
        %v1078 = vlaneseq
        %v1079 = vshrl.u32 %v1078, 7
        %v1080 = vsub.s32 %v803, %v1079
        %v1081 = vrot.slane %v714, %v1080
        %v1082 = vsel %vm808, %v1081, %v1077
        %v1083 = vlaneseq
        %v1084 = vshrl.u32 %v1083, 7
        %v1085 = vsub.s32 %v756, %v1084
        %v1086 = vrot.slane %v715, %v1085
        %v1087 = vlaneseq
        %v1088 = vshrl.u32 %v1087, 7
        %v1089 = vsub.s32 %v761, %v1088
        %v1090 = vrot.slane %v716, %v1089
        %v1091 = vsel %vm766, %v1090, %v1086
        %v1092 = vlaneseq
        %v1093 = vshrl.u32 %v1092, 7
        %v1094 = vsub.s32 %v768, %v1093
        %v1095 = vrot.slane %v717, %v1094
        %v1096 = vsel %vm773, %v1095, %v1091
        %v1097 = vlaneseq
        %v1098 = vshrl.u32 %v1097, 7
        %v1099 = vsub.s32 %v775, %v1098
        %v1100 = vrot.slane %v718, %v1099
        %v1101 = vsel %vm780, %v1100, %v1096
        %v1102 = vlaneseq
        %v1103 = vshrl.u32 %v1102, 7
        %v1104 = vsub.s32 %v782, %v1103
        %v1105 = vrot.slane %v719, %v1104
        %v1106 = vsel %vm787, %v1105, %v1101
        %v1107 = vlaneseq
        %v1108 = vshrl.u32 %v1107, 7
        %v1109 = vsub.s32 %v789, %v1108
        %v1110 = vrot.slane %v720, %v1109
        %v1111 = vsel %vm794, %v1110, %v1106
        %v1112 = vlaneseq
        %v1113 = vshrl.u32 %v1112, 7
        %v1114 = vsub.s32 %v796, %v1113
        %v1115 = vrot.slane %v721, %v1114
        %v1116 = vsel %vm801, %v1115, %v1111
        %v1117 = vlaneseq
        %v1118 = vshrl.u32 %v1117, 7
        %v1119 = vsub.s32 %v803, %v1118
        %v1120 = vrot.slane %v722, %v1119
        %v1121 = vsel %vm808, %v1120, %v1116
        %vm1122 = vcmask 1045509
        %v1123 = vsel %vm1122, %v1043, %v1004
        %vm1124 = vcmask 1046534
        %v1125 = vsel %vm1124, %v1082, %v1123
        %vm1126 = vcmask 1047559
        %v1127 = vsel %vm1126, %v1121, %v1125
        %vm1129 = vcmask 1043456
        %v1130 = vsel %vm1129, %v932, %v1127
        %v1131 = vld [vmem:[%s1] sm:$0xff]
        %v1132 = vld [vmem:[%s1 + $0x8] sm:$0xff]
        %v1133 = vld [vmem:[%s1 + $0x10] sm:$0xff]
        %v1134 = vld [vmem:[%s1 + $0x18] sm:$0xff]
        %v1135 = vld [vmem:[%s1 + $0x20] sm:$0xff]
        %v1136 = vld [vmem:[%s1 + $0x28] sm:$0xff]
        %v1137 = vld [vmem:[%s1 + $0x30] sm:$0xff]
        %v1138 = vld [vmem:[%s1 + $0x38] sm:$0xff]
        %v1139 = vld [vmem:[%s1 + $0x40] sm:$0x1]
        %v1140 = vld [vmem:[%s1 + $0x48] sm:$0xff]
        %v1141 = vld [vmem:[%s1 + $0x50] sm:$0xff]
        %v1142 = vld [vmem:[%s1 + $0x58] sm:$0xff]
        %v1143 = vld [vmem:[%s1 + $0x60] sm:$0xff]
        %v1144 = vld [vmem:[%s1 + $0x68] sm:$0x1]
        %v1145 = vld [vmem:[%s1 + $0x70] sm:$0xff]
        %v1146 = vld [vmem:[%s1 + $0x78] sm:$0x1]
        %v1147 = vlaneseq
        %v1148 = vshrl.u32 %v1147, 7
        %v1149 = vsub.s32 0, %v1148
        %v1150 = vrot.slane %v1139, %v1149
        %vm1151 = vcmask 523264
        %v1153 = vsel %vm1151, %v1130, 0
        %1155 = vmatprep.subr.mxu0 0.0
        %1156 = vmatpush1.msra.mxu0 %v1131
        %1157 = vmatprep.subr.mxu0 0.0
        %1158 = vmatpush1.msra.mxu0 %v1132
        %1159 = vmatprep.subr.mxu0 0.0
        %1160 = vmatpush1.msra.mxu0 %v1133
        %1161 = vmatprep.subr.mxu0 0.0
        %1162 = vmatpush1.msra.mxu0 %v1134
        %1163 = vmatprep.subr.mxu0 0.0
        %1164 = vmatpush1.msra.mxu0 %v1135
        %1165 = vmatprep.subr.mxu0 0.0
        %1166 = vmatpush1.msra.mxu0 %v1136
        %1167 = vmatprep.subr.mxu0 0.0
        %1168 = vmatpush1.msra.mxu0 %v1137
        %1169 = vmatprep.subr.mxu0 0.0
        %1170 = vmatpush1.msra.mxu0 %v1138
        %1171 = vmatprep.subr.mxu0 0.0
        %1172 = vmatpush1.msra.mxu0 0.0
        %1173 = vmatprep.subr.mxu0 0.0
        %1174 = vmatpush1.msra.mxu0 0.0
        %1175 = vmatprep.subr.mxu0 0.0
        %1176 = vmatpush1.msra.mxu0 0.0
        %1177 = vmatprep.subr.mxu0 0.0
        %1178 = vmatpush1.msra.mxu0 0.0
        %1179 = vmatprep.subr.mxu0 0.0
        %1180 = vmatpush1.msra.mxu0 0.0
        %1181 = vmatprep.subr.mxu0 0.0
        %1182 = vmatpush1.msra.mxu0 0.0
        %1183 = vmatprep.subr.mxu0 0.0
        %1184 = vmatpush1.msra.mxu0 0.0
        %1185 = vmatprep.subr.mxu0 0.0
        %1186 = vmatpush1.msra.mxu0 0.0
        %1187 = vmatprep.subr.mxu0 0.0
        %1188 = vmatpush1.msra.mxu0 0.0
        %1189 = vmatprep.subr.mxu0 0.0
        %1190 = vmatpush1.msra.mxu0 0.0
        %1191 = vmatprep.subr.mxu0 0.0
        %1192 = vmatpush1.msra.mxu0 0.0
        %1193 = vmatprep.subr.mxu0 0.0
        %1194 = vmatpush1.msra.mxu0 0.0
        %1195 = vmatprep.subr.mxu0 0.0
        %1196 = vmatpush1.msra.mxu0 0.0
        %1197 = vmatprep.subr.mxu0 0.0
        %1198 = vmatpush1.msra.mxu0 0.0
        %1199 = vmatprep.subr.mxu0 0.0
        %1200 = vmatpush1.msra.mxu0 0.0
        %1201 = vmatprep.subr.mxu0 0.0
        %1202 = vmatpush1.msra.mxu0 0.0
        %1203 = vmatprep.subr.mxu0 0.0
        %1204 = vmatpush1.msra.mxu0 0.0
        %1205 = vmatprep.subr.mxu0 0.0
        %1206 = vmatpush1.msra.mxu0 0.0
        %1207 = vmatprep.subr.mxu0 0.0
        %1208 = vmatpush1.msra.mxu0 0.0
        %1209 = vmatprep.subr.mxu0 0.0
        %1210 = vmatpush1.msra.mxu0 0.0
        %1211 = vmatprep.subr.mxu0 0.0
        %1212 = vmatpush1.msra.mxu0 0.0
        %1213 = vmatprep.subr.mxu0 0.0
        %1214 = vmatpush1.msra.mxu0 0.0
        %1215 = vmatprep.subr.mxu0 0.0
        %1216 = vmatpush1.msra.mxu0 0.0
        %1217 = vmatprep.subr.mxu0 0.0
        %1218 = vmatpush1.msra.mxu0 0.0
        %1219 = vmatprep.mubr.f32.mxu0 0.0
        %1220 = vmatmul.mubr.f32.gmra.mrb[0].mxu0 %v1153
        %v1221 = vpop.f32.mrb[0].mxu0
        %v1222 = vadd.f32 %v1150, %v1221
        %v1223 = vpop.f32.mrb[0].mxu0
        %1224 = vdwg.mxu0
        %v1225 = vmax.f32 %v1222, 0.0
        %v1226 = vrot.slane %v1225, 4
        %vm1227 = vcmask 130048
        %v1229 = vsel %vm1227, %v1226, 0
        %1231 = vmatprep.subr.mxu0 0.0
        %1232 = vmatpush1.msra.mxu0 %v1142
        %1233 = vmatprep.subr.mxu0 0.0
        %1234 = vmatpush1.msra.mxu0 %v1143
        %1235 = vmatprep.subr.mxu0 0.0
        %1236 = vmatpush1.msra.mxu0 0.0
        %1237 = vmatprep.subr.mxu0 0.0
        %1238 = vmatpush1.msra.mxu0 0.0
        %1239 = vmatprep.subr.mxu0 0.0
        %1240 = vmatpush1.msra.mxu0 0.0
        %1241 = vmatprep.subr.mxu0 0.0
        %1242 = vmatpush1.msra.mxu0 0.0
        %1243 = vmatprep.subr.mxu0 0.0
        %1244 = vmatpush1.msra.mxu0 0.0
        %1245 = vmatprep.subr.mxu0 0.0
        %1246 = vmatpush1.msra.mxu0 0.0
        %1247 = vmatprep.subr.mxu0 0.0
        %1248 = vmatpush1.msra.mxu0 0.0
        %1249 = vmatprep.subr.mxu0 0.0
        %1250 = vmatpush1.msra.mxu0 0.0
        %1251 = vmatprep.subr.mxu0 0.0
        %1252 = vmatpush1.msra.mxu0 0.0
        %1253 = vmatprep.subr.mxu0 0.0
        %1254 = vmatpush1.msra.mxu0 0.0
        %1255 = vmatprep.subr.mxu0 0.0
        %1256 = vmatpush1.msra.mxu0 0.0
        %1257 = vmatprep.subr.mxu0 0.0
        %1258 = vmatpush1.msra.mxu0 0.0
        %1259 = vmatprep.subr.mxu0 0.0
        %1260 = vmatpush1.msra.mxu0 0.0
        %1261 = vmatprep.subr.mxu0 0.0
        %1262 = vmatpush1.msra.mxu0 0.0
        %1263 = vmatprep.subr.mxu0 0.0
        %1264 = vmatpush1.msra.mxu0 0.0
        %1265 = vmatprep.subr.mxu0 0.0
        %1266 = vmatpush1.msra.mxu0 0.0
        %1267 = vmatprep.subr.mxu0 0.0
        %1268 = vmatpush1.msra.mxu0 0.0
        %1269 = vmatprep.subr.mxu0 0.0
        %1270 = vmatpush1.msra.mxu0 0.0
        %1271 = vmatprep.subr.mxu0 0.0
        %1272 = vmatpush1.msra.mxu0 0.0
        %1273 = vmatprep.subr.mxu0 0.0
        %1274 = vmatpush1.msra.mxu0 0.0
        %1275 = vmatprep.subr.mxu0 0.0
        %1276 = vmatpush1.msra.mxu0 0.0
        %1277 = vmatprep.subr.mxu0 0.0
        %1278 = vmatpush1.msra.mxu0 0.0
        %1279 = vmatprep.subr.mxu0 0.0
        %1280 = vmatpush1.msra.mxu0 0.0
        %1281 = vmatprep.subr.mxu0 0.0
        %1282 = vmatpush1.msra.mxu0 0.0
        %1283 = vmatprep.subr.mxu0 0.0
        %1284 = vmatpush1.msra.mxu0 0.0
        %1285 = vmatprep.subr.mxu0 0.0
        %1286 = vmatpush1.msra.mxu0 0.0
        %1287 = vmatprep.subr.mxu0 0.0
        %1288 = vmatpush1.msra.mxu0 0.0
        %1289 = vmatprep.subr.mxu0 0.0
        %1290 = vmatpush1.msra.mxu0 0.0
        %1291 = vmatprep.subr.mxu0 0.0
        %1292 = vmatpush1.msra.mxu0 0.0
        %1293 = vmatprep.subr.mxu0 0.0
        %1294 = vmatpush1.msra.mxu0 0.0
        %1295 = vmatprep.mubr.f32.mxu0 0.0
        %1296 = vmatmul.mubr.f32.gmra.mrb[0].mxu0 %v1229
        %v1297 = vpop.f32.mrb[0].mxu0
        %v1298 = vadd.f32 0.0, %v1297
        %v1299 = vpop.f32.mrb[0].mxu0
        %1300 = vdwg.mxu0
        %v1302 = vsel %vm1227, %v1225, 0
        %1304 = vmatprep.subr.mxu0 0.0
        %1305 = vmatpush1.msra.mxu0 %v1140
        %1306 = vmatprep.subr.mxu0 0.0
        %1307 = vmatpush1.msra.mxu0 %v1141
        %1308 = vmatprep.subr.mxu0 0.0
        %1309 = vmatpush1.msra.mxu0 0.0
        %1310 = vmatprep.subr.mxu0 0.0
        %1311 = vmatpush1.msra.mxu0 0.0
        %1312 = vmatprep.subr.mxu0 0.0
        %1313 = vmatpush1.msra.mxu0 0.0
        %1314 = vmatprep.subr.mxu0 0.0
        %1315 = vmatpush1.msra.mxu0 0.0
        %1316 = vmatprep.subr.mxu0 0.0
        %1317 = vmatpush1.msra.mxu0 0.0
        %1318 = vmatprep.subr.mxu0 0.0
        %1319 = vmatpush1.msra.mxu0 0.0
        %1320 = vmatprep.subr.mxu0 0.0
        %1321 = vmatpush1.msra.mxu0 0.0
        %1322 = vmatprep.subr.mxu0 0.0
        %1323 = vmatpush1.msra.mxu0 0.0
        %1324 = vmatprep.subr.mxu0 0.0
        %1325 = vmatpush1.msra.mxu0 0.0
        %1326 = vmatprep.subr.mxu0 0.0
        %1327 = vmatpush1.msra.mxu0 0.0
        %1328 = vmatprep.subr.mxu0 0.0
        %1329 = vmatpush1.msra.mxu0 0.0
        %1330 = vmatprep.subr.mxu0 0.0
        %1331 = vmatpush1.msra.mxu0 0.0
        %1332 = vmatprep.subr.mxu0 0.0
        %1333 = vmatpush1.msra.mxu0 0.0
        %1334 = vmatprep.subr.mxu0 0.0
        %1335 = vmatpush1.msra.mxu0 0.0
        %1336 = vmatprep.subr.mxu0 0.0
        %1337 = vmatpush1.msra.mxu0 0.0
        %1338 = vmatprep.subr.mxu0 0.0
        %1339 = vmatpush1.msra.mxu0 0.0
        %1340 = vmatprep.subr.mxu0 0.0
        %1341 = vmatpush1.msra.mxu0 0.0
        %1342 = vmatprep.subr.mxu0 0.0
        %1343 = vmatpush1.msra.mxu0 0.0
        %1344 = vmatprep.subr.mxu0 0.0
        %1345 = vmatpush1.msra.mxu0 0.0
        %1346 = vmatprep.subr.mxu0 0.0
        %1347 = vmatpush1.msra.mxu0 0.0
        %1348 = vmatprep.subr.mxu0 0.0
        %1349 = vmatpush1.msra.mxu0 0.0
        %1350 = vmatprep.subr.mxu0 0.0
        %1351 = vmatpush1.msra.mxu0 0.0
        %1352 = vmatprep.subr.mxu0 0.0
        %1353 = vmatpush1.msra.mxu0 0.0
        %1354 = vmatprep.subr.mxu0 0.0
        %1355 = vmatpush1.msra.mxu0 0.0
        %1356 = vmatprep.subr.mxu0 0.0
        %1357 = vmatpush1.msra.mxu0 0.0
        %1358 = vmatprep.subr.mxu0 0.0
        %1359 = vmatpush1.msra.mxu0 0.0
        %1360 = vmatprep.subr.mxu0 0.0
        %1361 = vmatpush1.msra.mxu0 0.0
        %1362 = vmatprep.subr.mxu0 0.0
        %1363 = vmatpush1.msra.mxu0 0.0
        %1364 = vmatprep.subr.mxu0 0.0
        %1365 = vmatpush1.msra.mxu0 0.0
        %1366 = vmatprep.subr.mxu0 0.0
        %1367 = vmatpush1.msra.mxu0 0.0
        %1368 = vmatprep.mubr.f32.mxu0 0.0
        %1369 = vmatmul.mubr.f32.gmra.mrb[0].mxu0 %v1302
        %v1370 = vpop.f32.mrb[0].mxu0
        %v1371 = vadd.f32 %v1298, %v1370
        %v1372 = vpop.f32.mrb[0].mxu0
        %1373 = vdwg.mxu0
        %v1374 = vlaneseq
        %v1375 = vshrl.u32 %v1374, 7
        %v1376 = vsub.s32 0, %v1375
        %v1377 = vrot.slane %v1144, %v1376
        %v1378 = vadd.f32 %v1371, %v1377
        %v1379 = vmax.f32 %v1378, 0.0
        %v1380 = vxor.u32 %v1378, 2147483648
        %v1381 = vmul.f32 %v1380, 1.442695
        %v1382 = vpow.pop %v1381
        %v1383 = vadd.f32 %v1382, 1.0
        %v1384 = vrcp.pop %v1383
        %v1385 = vmul.f32 1.0, %v1384
        %v1386 = vlaneseq
        %v1387 = vshrl.u32 %v1386, 7
        %v1388 = vsub.s32 0, %v1387
        %v1389 = vrot.slane %v1146, %v1388
        %vm1390 = vcmask 64512
        %v1392 = vsel %vm1390, %v1379, 0
        %1394 = vmatprep.subr.mxu0 0.0
        %1395 = vmatpush1.msra.mxu0 %v1145
        %1396 = vmatprep.subr.mxu0 0.0
        %1397 = vmatpush1.msra.mxu0 0.0
        %1398 = vmatprep.subr.mxu0 0.0
        %1399 = vmatpush1.msra.mxu0 0.0
        %1400 = vmatprep.subr.mxu0 0.0
        %1401 = vmatpush1.msra.mxu0 0.0
        %1402 = vmatprep.subr.mxu0 0.0
        %1403 = vmatpush1.msra.mxu0 0.0
        %1404 = vmatprep.subr.mxu0 0.0
        %1405 = vmatpush1.msra.mxu0 0.0
        %1406 = vmatprep.subr.mxu0 0.0
        %1407 = vmatpush1.msra.mxu0 0.0
        %1408 = vmatprep.subr.mxu0 0.0
        %1409 = vmatpush1.msra.mxu0 0.0
        %1410 = vmatprep.subr.mxu0 0.0
        %1411 = vmatpush1.msra.mxu0 0.0
        %1412 = vmatprep.subr.mxu0 0.0
        %1413 = vmatpush1.msra.mxu0 0.0
        %1414 = vmatprep.subr.mxu0 0.0
        %1415 = vmatpush1.msra.mxu0 0.0
        %1416 = vmatprep.subr.mxu0 0.0
        %1417 = vmatpush1.msra.mxu0 0.0
        %1418 = vmatprep.subr.mxu0 0.0
        %1419 = vmatpush1.msra.mxu0 0.0
        %1420 = vmatprep.subr.mxu0 0.0
        %1421 = vmatpush1.msra.mxu0 0.0
        %1422 = vmatprep.subr.mxu0 0.0
        %1423 = vmatpush1.msra.mxu0 0.0
        %1424 = vmatprep.subr.mxu0 0.0
        %1425 = vmatpush1.msra.mxu0 0.0
        %1426 = vmatprep.subr.mxu0 0.0
        %1427 = vmatpush1.msra.mxu0 0.0
        %1428 = vmatprep.subr.mxu0 0.0
        %1429 = vmatpush1.msra.mxu0 0.0
        %1430 = vmatprep.subr.mxu0 0.0
        %1431 = vmatpush1.msra.mxu0 0.0
        %1432 = vmatprep.subr.mxu0 0.0
        %1433 = vmatpush1.msra.mxu0 0.0
        %1434 = vmatprep.subr.mxu0 0.0
        %1435 = vmatpush1.msra.mxu0 0.0
        %1436 = vmatprep.subr.mxu0 0.0
        %1437 = vmatpush1.msra.mxu0 0.0
        %1438 = vmatprep.subr.mxu0 0.0
        %1439 = vmatpush1.msra.mxu0 0.0
        %1440 = vmatprep.subr.mxu0 0.0
        %1441 = vmatpush1.msra.mxu0 0.0
        %1442 = vmatprep.subr.mxu0 0.0
        %1443 = vmatpush1.msra.mxu0 0.0
        %1444 = vmatprep.subr.mxu0 0.0
        %1445 = vmatpush1.msra.mxu0 0.0
        %1446 = vmatprep.subr.mxu0 0.0
        %1447 = vmatpush1.msra.mxu0 0.0
        %1448 = vmatprep.subr.mxu0 0.0
        %1449 = vmatpush1.msra.mxu0 0.0
        %1450 = vmatprep.subr.mxu0 0.0
        %1451 = vmatpush1.msra.mxu0 0.0
        %1452 = vmatprep.subr.mxu0 0.0
        %1453 = vmatpush1.msra.mxu0 0.0
        %1454 = vmatprep.subr.mxu0 0.0
        %1455 = vmatpush1.msra.mxu0 0.0
        %1456 = vmatprep.subr.mxu0 0.0
        %1457 = vmatpush1.msra.mxu0 0.0
        %1458 = vmatprep.mubr.f32.mxu0 0.0
        %1459 = vmatmul.mubr.f32.gmra.mrb[0].mxu0 %v1392
        %v1460 = vpop.f32.mrb[0].mxu0
        %v1461 = vadd.f32 %v1389, %v1460
        %v1462 = vpop.f32.mrb[0].mxu0
        %1463 = vdwg.mxu0
        %v1464 = vxor.u32 %v1461, 2147483648
        %v1465 = vmul.f32 %v1464, 1.442695
        %v1466 = vpow.pop %v1465
        %v1467 = vadd.f32 %v1466, 1.0
        %v1468 = vrcp.pop %v1467
        %v1469 = vmul.f32 1.0, %v1468
        %v1470 = vlaneseq
        %v1471 = vshrl.u32 %v1470, 7
        %v1472 = vsub.s32 0, %v1471
        %v1473 = vrot.slane %v1469, %v1472
        %1475 = vbcast.lane.b32.xlu0 %v1473, 256
        %v1476 = vpop.permute.xlu0 %1475
        %s1478 = sor.u32 256, 8
        %1479 = vbcast.lane.b32.xlu0 %v1473, %s1478
        %v1480 = vpop.permute.xlu0 %1479
        %s1482 = sor.u32 256, 16
        %1483 = vbcast.lane.b32.xlu0 %v1473, %s1482
        %v1484 = vpop.permute.xlu0 %1483
        %s1486 = sor.u32 256, 24
        %1487 = vbcast.lane.b32.xlu0 %v1473, %s1486
        %v1488 = vpop.permute.xlu0 %1487
        %s1490 = sor.u32 256, 32
        %1491 = vbcast.lane.b32.xlu0 %v1473, %s1490
        %v1492 = vpop.permute.xlu0 %1491
        %s1494 = sor.u32 256, 40
        %1495 = vbcast.lane.b32.xlu0 %v1473, %s1494
        %v1496 = vpop.permute.xlu0 %1495
        %s1498 = sor.u32 256, 48
        %1499 = vbcast.lane.b32.xlu0 %v1473, %s1498
        %v1500 = vpop.permute.xlu0 %1499
        %s1502 = sor.u32 256, 56
        %1503 = vbcast.lane.b32.xlu0 %v1473, %s1502
        %v1504 = vpop.permute.xlu0 %1503
        %v1505 = vlaneseq
        %v1506 = vshrl.u32 %v1505, 7
        %v1507 = vsub.s32 1, %v1506
        %v1508 = vrot.slane %v1469, %v1507
        %1510 = vbcast.lane.b32.xlu0 %v1508, 256
        %v1511 = vpop.permute.xlu0 %1510
        %s1513 = sor.u32 256, 8
        %1514 = vbcast.lane.b32.xlu0 %v1508, %s1513
        %v1515 = vpop.permute.xlu0 %1514
        %s1517 = sor.u32 256, 16
        %1518 = vbcast.lane.b32.xlu0 %v1508, %s1517
        %v1519 = vpop.permute.xlu0 %1518
        %s1521 = sor.u32 256, 24
        %1522 = vbcast.lane.b32.xlu0 %v1508, %s1521
        %v1523 = vpop.permute.xlu0 %1522
        %s1525 = sor.u32 256, 32
        %1526 = vbcast.lane.b32.xlu0 %v1508, %s1525
        %v1527 = vpop.permute.xlu0 %1526
        %s1529 = sor.u32 256, 40
        %1530 = vbcast.lane.b32.xlu0 %v1508, %s1529
        %v1531 = vpop.permute.xlu0 %1530
        %s1533 = sor.u32 256, 48
        %1534 = vbcast.lane.b32.xlu0 %v1508, %s1533
        %v1535 = vpop.permute.xlu0 %1534
        %s1537 = sor.u32 256, 56
        %1538 = vbcast.lane.b32.xlu0 %v1508, %s1537
        %v1539 = vpop.permute.xlu0 %1538
        %v1540 = vlaneseq
        %v1541 = vshrl.u32 %v1540, 7
        %v1542 = vsub.s32 2, %v1541
        %v1543 = vrot.slane %v1469, %v1542
        %1545 = vbcast.lane.b32.xlu0 %v1543, 256
        %v1546 = vpop.permute.xlu0 %1545
        %s1548 = sor.u32 256, 8
        %1549 = vbcast.lane.b32.xlu0 %v1543, %s1548
        %v1550 = vpop.permute.xlu0 %1549
        %s1552 = sor.u32 256, 16
        %1553 = vbcast.lane.b32.xlu0 %v1543, %s1552
        %v1554 = vpop.permute.xlu0 %1553
        %s1556 = sor.u32 256, 24
        %1557 = vbcast.lane.b32.xlu0 %v1543, %s1556
        %v1558 = vpop.permute.xlu0 %1557
        %s1560 = sor.u32 256, 32
        %1561 = vbcast.lane.b32.xlu0 %v1543, %s1560
        %v1562 = vpop.permute.xlu0 %1561
        %s1564 = sor.u32 256, 40
        %1565 = vbcast.lane.b32.xlu0 %v1543, %s1564
        %v1566 = vpop.permute.xlu0 %1565
        %s1568 = sor.u32 256, 48
        %1569 = vbcast.lane.b32.xlu0 %v1543, %s1568
        %v1570 = vpop.permute.xlu0 %1569
        %s1572 = sor.u32 256, 56
        %1573 = vbcast.lane.b32.xlu0 %v1543, %s1572
        %v1574 = vpop.permute.xlu0 %1573
        %v1575 = vlaneseq
        %v1576 = vshrl.u32 %v1575, 7
        %v1577 = vsub.s32 3, %v1576
        %v1578 = vrot.slane %v1469, %v1577
        %1580 = vbcast.lane.b32.xlu0 %v1578, 256
        %v1581 = vpop.permute.xlu0 %1580
        %s1583 = sor.u32 256, 8
        %1584 = vbcast.lane.b32.xlu0 %v1578, %s1583
        %v1585 = vpop.permute.xlu0 %1584
        %s1587 = sor.u32 256, 16
        %1588 = vbcast.lane.b32.xlu0 %v1578, %s1587
        %v1589 = vpop.permute.xlu0 %1588
        %s1591 = sor.u32 256, 24
        %1592 = vbcast.lane.b32.xlu0 %v1578, %s1591
        %v1593 = vpop.permute.xlu0 %1592
        %s1595 = sor.u32 256, 32
        %1596 = vbcast.lane.b32.xlu0 %v1578, %s1595
        %v1597 = vpop.permute.xlu0 %1596
        %s1599 = sor.u32 256, 40
        %1600 = vbcast.lane.b32.xlu0 %v1578, %s1599
        %v1601 = vpop.permute.xlu0 %1600
        %s1603 = sor.u32 256, 48
        %1604 = vbcast.lane.b32.xlu0 %v1578, %s1603
        %v1605 = vpop.permute.xlu0 %1604
        %s1607 = sor.u32 256, 56
        %1608 = vbcast.lane.b32.xlu0 %v1578, %s1607
        %v1609 = vpop.permute.xlu0 %1608
        %v1610 = vlaneseq
        %v1611 = vshrl.u32 %v1610, 7
        %v1612 = vsub.s32 4, %v1611
        %v1613 = vrot.slane %v1469, %v1612
        %1615 = vbcast.lane.b32.xlu0 %v1613, 256
        %v1616 = vpop.permute.xlu0 %1615
        %s1618 = sor.u32 256, 8
        %1619 = vbcast.lane.b32.xlu0 %v1613, %s1618
        %v1620 = vpop.permute.xlu0 %1619
        %s1622 = sor.u32 256, 16
        %1623 = vbcast.lane.b32.xlu0 %v1613, %s1622
        %v1624 = vpop.permute.xlu0 %1623
        %s1626 = sor.u32 256, 24
        %1627 = vbcast.lane.b32.xlu0 %v1613, %s1626
        %v1628 = vpop.permute.xlu0 %1627
        %s1630 = sor.u32 256, 32
        %1631 = vbcast.lane.b32.xlu0 %v1613, %s1630
        %v1632 = vpop.permute.xlu0 %1631
        %s1634 = sor.u32 256, 40
        %1635 = vbcast.lane.b32.xlu0 %v1613, %s1634
        %v1636 = vpop.permute.xlu0 %1635
        %s1638 = sor.u32 256, 48
        %1639 = vbcast.lane.b32.xlu0 %v1613, %s1638
        %v1640 = vpop.permute.xlu0 %1639
        %s1642 = sor.u32 256, 56
        %1643 = vbcast.lane.b32.xlu0 %v1613, %s1642
        %v1644 = vpop.permute.xlu0 %1643
        %v1645 = vlaneseq
        %v1646 = vshrl.u32 %v1645, 7
        %v1647 = vsub.s32 5, %v1646
        %v1648 = vrot.slane %v1469, %v1647
        %1650 = vbcast.lane.b32.xlu0 %v1648, 256
        %v1651 = vpop.permute.xlu0 %1650
        %s1653 = sor.u32 256, 8
        %1654 = vbcast.lane.b32.xlu0 %v1648, %s1653
        %v1655 = vpop.permute.xlu0 %1654
        %s1657 = sor.u32 256, 16
        %1658 = vbcast.lane.b32.xlu0 %v1648, %s1657
        %v1659 = vpop.permute.xlu0 %1658
        %s1661 = sor.u32 256, 24
        %1662 = vbcast.lane.b32.xlu0 %v1648, %s1661
        %v1663 = vpop.permute.xlu0 %1662
        %s1665 = sor.u32 256, 32
        %1666 = vbcast.lane.b32.xlu0 %v1648, %s1665
        %v1667 = vpop.permute.xlu0 %1666
        %s1669 = sor.u32 256, 40
        %1670 = vbcast.lane.b32.xlu0 %v1648, %s1669
        %v1671 = vpop.permute.xlu0 %1670
        %s1673 = sor.u32 256, 48
        %1674 = vbcast.lane.b32.xlu0 %v1648, %s1673
        %v1675 = vpop.permute.xlu0 %1674
        %s1677 = sor.u32 256, 56
        %1678 = vbcast.lane.b32.xlu0 %v1648, %s1677
        %v1679 = vpop.permute.xlu0 %1678
        %v1680 = vlaneseq
        %v1681 = vshrl.u32 %v1680, 7
        %v1682 = vsub.s32 6, %v1681
        %v1683 = vrot.slane %v1469, %v1682
        %1685 = vbcast.lane.b32.xlu0 %v1683, 256
        %v1686 = vpop.permute.xlu0 %1685
        %s1688 = sor.u32 256, 8
        %1689 = vbcast.lane.b32.xlu0 %v1683, %s1688
        %v1690 = vpop.permute.xlu0 %1689
        %s1692 = sor.u32 256, 16
        %1693 = vbcast.lane.b32.xlu0 %v1683, %s1692
        %v1694 = vpop.permute.xlu0 %1693
        %s1696 = sor.u32 256, 24
        %1697 = vbcast.lane.b32.xlu0 %v1683, %s1696
        %v1698 = vpop.permute.xlu0 %1697
        %s1700 = sor.u32 256, 32
        %1701 = vbcast.lane.b32.xlu0 %v1683, %s1700
        %v1702 = vpop.permute.xlu0 %1701
        %s1704 = sor.u32 256, 40
        %1705 = vbcast.lane.b32.xlu0 %v1683, %s1704
        %v1706 = vpop.permute.xlu0 %1705
        %s1708 = sor.u32 256, 48
        %1709 = vbcast.lane.b32.xlu0 %v1683, %s1708
        %v1710 = vpop.permute.xlu0 %1709
        %s1712 = sor.u32 256, 56
        %1713 = vbcast.lane.b32.xlu0 %v1683, %s1712
        %v1714 = vpop.permute.xlu0 %1713
        %v1715 = vlaneseq
        %v1716 = vshrl.u32 %v1715, 7
        %v1717 = vsub.s32 7, %v1716
        %v1718 = vrot.slane %v1469, %v1717
        %1720 = vbcast.lane.b32.xlu0 %v1718, 256
        %v1721 = vpop.permute.xlu0 %1720
        %s1723 = sor.u32 256, 8
        %1724 = vbcast.lane.b32.xlu0 %v1718, %s1723
        %v1725 = vpop.permute.xlu0 %1724
        %s1727 = sor.u32 256, 16
        %1728 = vbcast.lane.b32.xlu0 %v1718, %s1727
        %v1729 = vpop.permute.xlu0 %1728
        %s1731 = sor.u32 256, 24
        %1732 = vbcast.lane.b32.xlu0 %v1718, %s1731
        %v1733 = vpop.permute.xlu0 %1732
        %s1735 = sor.u32 256, 32
        %1736 = vbcast.lane.b32.xlu0 %v1718, %s1735
        %v1737 = vpop.permute.xlu0 %1736
        %s1739 = sor.u32 256, 40
        %1740 = vbcast.lane.b32.xlu0 %v1718, %s1739
        %v1741 = vpop.permute.xlu0 %1740
        %s1743 = sor.u32 256, 48
        %1744 = vbcast.lane.b32.xlu0 %v1718, %s1743
        %v1745 = vpop.permute.xlu0 %1744
        %s1747 = sor.u32 256, 56
        %1748 = vbcast.lane.b32.xlu0 %v1718, %s1747
        %v1749 = vpop.permute.xlu0 %1748
        %v1750 = vlaneseq
        %v1751 = vshrl.u32 %v1750, 7
        %v1752 = vsub.s32 0, %v1751
        %v1753 = vrot.slane %v1385, %v1752
        %s1755 = sor.u32 256, 8
        %1756 = vbcast.lane.b32.xlu0 %v1753, %s1755
        %v1757 = vpop.permute.xlu0 %1756
        %s1759 = sor.u32 256, 16
        %1760 = vbcast.lane.b32.xlu0 %v1753, %s1759
        %v1761 = vpop.permute.xlu0 %1760
        %s1763 = sor.u32 256, 24
        %1764 = vbcast.lane.b32.xlu0 %v1753, %s1763
        %v1765 = vpop.permute.xlu0 %1764
        %s1767 = sor.u32 256, 32
        %1768 = vbcast.lane.b32.xlu0 %v1753, %s1767
        %v1769 = vpop.permute.xlu0 %1768
        %s1771 = sor.u32 256, 40
        %1772 = vbcast.lane.b32.xlu0 %v1753, %s1771
        %v1773 = vpop.permute.xlu0 %1772
        %s1775 = sor.u32 256, 48
        %1776 = vbcast.lane.b32.xlu0 %v1753, %s1775
        %v1777 = vpop.permute.xlu0 %1776
        %s1779 = sor.u32 256, 56
        %1780 = vbcast.lane.b32.xlu0 %v1753, %s1779
        %v1781 = vpop.permute.xlu0 %1780
        %s1783 = sor.u32 256, 64
        %1784 = vbcast.lane.b32.xlu0 %v1753, %s1783
        %v1785 = vpop.permute.xlu0 %1784
        %v1786 = vlaneseq
        %v1787 = vshrl.u32 %v1786, 7
        %v1788 = vsub.s32 1, %v1787
        %v1789 = vrot.slane %v1385, %v1788
        %s1791 = sor.u32 256, 8
        %1792 = vbcast.lane.b32.xlu0 %v1789, %s1791
        %v1793 = vpop.permute.xlu0 %1792
        %s1795 = sor.u32 256, 16
        %1796 = vbcast.lane.b32.xlu0 %v1789, %s1795
        %v1797 = vpop.permute.xlu0 %1796
        %s1799 = sor.u32 256, 24
        %1800 = vbcast.lane.b32.xlu0 %v1789, %s1799
        %v1801 = vpop.permute.xlu0 %1800
        %s1803 = sor.u32 256, 32
        %1804 = vbcast.lane.b32.xlu0 %v1789, %s1803
        %v1805 = vpop.permute.xlu0 %1804
        %s1807 = sor.u32 256, 40
        %1808 = vbcast.lane.b32.xlu0 %v1789, %s1807
        %v1809 = vpop.permute.xlu0 %1808
        %s1811 = sor.u32 256, 48
        %1812 = vbcast.lane.b32.xlu0 %v1789, %s1811
        %v1813 = vpop.permute.xlu0 %1812
        %s1815 = sor.u32 256, 56
        %1816 = vbcast.lane.b32.xlu0 %v1789, %s1815
        %v1817 = vpop.permute.xlu0 %1816
        %s1819 = sor.u32 256, 64
        %1820 = vbcast.lane.b32.xlu0 %v1789, %s1819
        %v1821 = vpop.permute.xlu0 %1820
        %v1822 = vlaneseq
        %v1823 = vshrl.u32 %v1822, 7
        %v1824 = vsub.s32 2, %v1823
        %v1825 = vrot.slane %v1385, %v1824
        %s1827 = sor.u32 256, 8
        %1828 = vbcast.lane.b32.xlu0 %v1825, %s1827
        %v1829 = vpop.permute.xlu0 %1828
        %s1831 = sor.u32 256, 16
        %1832 = vbcast.lane.b32.xlu0 %v1825, %s1831
        %v1833 = vpop.permute.xlu0 %1832
        %s1835 = sor.u32 256, 24
        %1836 = vbcast.lane.b32.xlu0 %v1825, %s1835
        %v1837 = vpop.permute.xlu0 %1836
        %s1839 = sor.u32 256, 32
        %1840 = vbcast.lane.b32.xlu0 %v1825, %s1839
        %v1841 = vpop.permute.xlu0 %1840
        %s1843 = sor.u32 256, 40
        %1844 = vbcast.lane.b32.xlu0 %v1825, %s1843
        %v1845 = vpop.permute.xlu0 %1844
        %s1847 = sor.u32 256, 48
        %1848 = vbcast.lane.b32.xlu0 %v1825, %s1847
        %v1849 = vpop.permute.xlu0 %1848
        %s1851 = sor.u32 256, 56
        %1852 = vbcast.lane.b32.xlu0 %v1825, %s1851
        %v1853 = vpop.permute.xlu0 %1852
        %s1855 = sor.u32 256, 64
        %1856 = vbcast.lane.b32.xlu0 %v1825, %s1855
        %v1857 = vpop.permute.xlu0 %1856
        %v1858 = vlaneseq
        %v1859 = vshrl.u32 %v1858, 7
        %v1860 = vsub.s32 3, %v1859
        %v1861 = vrot.slane %v1385, %v1860
        %s1863 = sor.u32 256, 8
        %1864 = vbcast.lane.b32.xlu0 %v1861, %s1863
        %v1865 = vpop.permute.xlu0 %1864
        %s1867 = sor.u32 256, 16
        %1868 = vbcast.lane.b32.xlu0 %v1861, %s1867
        %v1869 = vpop.permute.xlu0 %1868
        %s1871 = sor.u32 256, 24
        %1872 = vbcast.lane.b32.xlu0 %v1861, %s1871
        %v1873 = vpop.permute.xlu0 %1872
        %s1875 = sor.u32 256, 32
        %1876 = vbcast.lane.b32.xlu0 %v1861, %s1875
        %v1877 = vpop.permute.xlu0 %1876
        %s1879 = sor.u32 256, 40
        %1880 = vbcast.lane.b32.xlu0 %v1861, %s1879
        %v1881 = vpop.permute.xlu0 %1880
        %s1883 = sor.u32 256, 48
        %1884 = vbcast.lane.b32.xlu0 %v1861, %s1883
        %v1885 = vpop.permute.xlu0 %1884
        %s1887 = sor.u32 256, 56
        %1888 = vbcast.lane.b32.xlu0 %v1861, %s1887
        %v1889 = vpop.permute.xlu0 %1888
        %s1891 = sor.u32 256, 64
        %1892 = vbcast.lane.b32.xlu0 %v1861, %s1891
        %v1893 = vpop.permute.xlu0 %1892
        %v1894 = vlaneseq
        %v1895 = vshrl.u32 %v1894, 7
        %v1896 = vsub.s32 4, %v1895
        %v1897 = vrot.slane %v1385, %v1896
        %s1899 = sor.u32 256, 8
        %1900 = vbcast.lane.b32.xlu0 %v1897, %s1899
        %v1901 = vpop.permute.xlu0 %1900
        %s1903 = sor.u32 256, 16
        %1904 = vbcast.lane.b32.xlu0 %v1897, %s1903
        %v1905 = vpop.permute.xlu0 %1904
        %s1907 = sor.u32 256, 24
        %1908 = vbcast.lane.b32.xlu0 %v1897, %s1907
        %v1909 = vpop.permute.xlu0 %1908
        %s1911 = sor.u32 256, 32
        %1912 = vbcast.lane.b32.xlu0 %v1897, %s1911
        %v1913 = vpop.permute.xlu0 %1912
        %s1915 = sor.u32 256, 40
        %1916 = vbcast.lane.b32.xlu0 %v1897, %s1915
        %v1917 = vpop.permute.xlu0 %1916
        %s1919 = sor.u32 256, 48
        %1920 = vbcast.lane.b32.xlu0 %v1897, %s1919
        %v1921 = vpop.permute.xlu0 %1920
        %s1923 = sor.u32 256, 56
        %1924 = vbcast.lane.b32.xlu0 %v1897, %s1923
        %v1925 = vpop.permute.xlu0 %1924
        %s1927 = sor.u32 256, 64
        %1928 = vbcast.lane.b32.xlu0 %v1897, %s1927
        %v1929 = vpop.permute.xlu0 %1928
        %v1930 = vlaneseq
        %v1931 = vshrl.u32 %v1930, 7
        %v1932 = vsub.s32 5, %v1931
        %v1933 = vrot.slane %v1385, %v1932
        %s1935 = sor.u32 256, 8
        %1936 = vbcast.lane.b32.xlu0 %v1933, %s1935
        %v1937 = vpop.permute.xlu0 %1936
        %s1939 = sor.u32 256, 16
        %1940 = vbcast.lane.b32.xlu0 %v1933, %s1939
        %v1941 = vpop.permute.xlu0 %1940
        %s1943 = sor.u32 256, 24
        %1944 = vbcast.lane.b32.xlu0 %v1933, %s1943
        %v1945 = vpop.permute.xlu0 %1944
        %s1947 = sor.u32 256, 32
        %1948 = vbcast.lane.b32.xlu0 %v1933, %s1947
        %v1949 = vpop.permute.xlu0 %1948
        %s1951 = sor.u32 256, 40
        %1952 = vbcast.lane.b32.xlu0 %v1933, %s1951
        %v1953 = vpop.permute.xlu0 %1952
        %s1955 = sor.u32 256, 48
        %1956 = vbcast.lane.b32.xlu0 %v1933, %s1955
        %v1957 = vpop.permute.xlu0 %1956
        %s1959 = sor.u32 256, 56
        %1960 = vbcast.lane.b32.xlu0 %v1933, %s1959
        %v1961 = vpop.permute.xlu0 %1960
        %s1963 = sor.u32 256, 64
        %1964 = vbcast.lane.b32.xlu0 %v1933, %s1963
        %v1965 = vpop.permute.xlu0 %1964
        %v1966 = vlaneseq
        %v1967 = vshrl.u32 %v1966, 7
        %v1968 = vsub.s32 6, %v1967
        %v1969 = vrot.slane %v1385, %v1968
        %s1971 = sor.u32 256, 8
        %1972 = vbcast.lane.b32.xlu0 %v1969, %s1971
        %v1973 = vpop.permute.xlu0 %1972
        %s1975 = sor.u32 256, 16
        %1976 = vbcast.lane.b32.xlu0 %v1969, %s1975
        %v1977 = vpop.permute.xlu0 %1976
        %s1979 = sor.u32 256, 24
        %1980 = vbcast.lane.b32.xlu0 %v1969, %s1979
        %v1981 = vpop.permute.xlu0 %1980
        %s1983 = sor.u32 256, 32
        %1984 = vbcast.lane.b32.xlu0 %v1969, %s1983
        %v1985 = vpop.permute.xlu0 %1984
        %s1987 = sor.u32 256, 40
        %1988 = vbcast.lane.b32.xlu0 %v1969, %s1987
        %v1989 = vpop.permute.xlu0 %1988
        %s1991 = sor.u32 256, 48
        %1992 = vbcast.lane.b32.xlu0 %v1969, %s1991
        %v1993 = vpop.permute.xlu0 %1992
        %s1995 = sor.u32 256, 56
        %1996 = vbcast.lane.b32.xlu0 %v1969, %s1995
        %v1997 = vpop.permute.xlu0 %1996
        %s1999 = sor.u32 256, 64
        %2000 = vbcast.lane.b32.xlu0 %v1969, %s1999
        %v2001 = vpop.permute.xlu0 %2000
        %v2002 = vlaneseq
        %v2003 = vshrl.u32 %v2002, 7
        %v2004 = vsub.s32 7, %v2003
        %v2005 = vrot.slane %v1385, %v2004
        %s2007 = sor.u32 256, 8
        %2008 = vbcast.lane.b32.xlu0 %v2005, %s2007
        %v2009 = vpop.permute.xlu0 %2008
        %s2011 = sor.u32 256, 16
        %2012 = vbcast.lane.b32.xlu0 %v2005, %s2011
        %v2013 = vpop.permute.xlu0 %2012
        %s2015 = sor.u32 256, 24
        %2016 = vbcast.lane.b32.xlu0 %v2005, %s2015
        %v2017 = vpop.permute.xlu0 %2016
        %s2019 = sor.u32 256, 32
        %2020 = vbcast.lane.b32.xlu0 %v2005, %s2019
        %v2021 = vpop.permute.xlu0 %2020
        %s2023 = sor.u32 256, 40
        %2024 = vbcast.lane.b32.xlu0 %v2005, %s2023
        %v2025 = vpop.permute.xlu0 %2024
        %s2027 = sor.u32 256, 48
        %2028 = vbcast.lane.b32.xlu0 %v2005, %s2027
        %v2029 = vpop.permute.xlu0 %2028
        %s2031 = sor.u32 256, 56
        %2032 = vbcast.lane.b32.xlu0 %v2005, %s2031
        %v2033 = vpop.permute.xlu0 %2032
        %s2035 = sor.u32 256, 64
        %2036 = vbcast.lane.b32.xlu0 %v2005, %s2035
        %v2037 = vpop.permute.xlu0 %2036
        %v2038 = vmul.f32 %v1476, %v466
        %v2039 = vmul.f32 %v1480, %v467
        %v2040 = vmul.f32 %v1484, %v468
        %v2041 = vmul.f32 %v1488, %v469
        %v2042 = vmul.f32 %v1492, %v470
        %v2043 = vmul.f32 %v1496, %v471
        %v2044 = vmul.f32 %v1500, %v472
        %v2045 = vmul.f32 %v1504, %v473
        %v2046 = vmul.f32 %v1511, %v474
        %v2047 = vmul.f32 %v1515, %v475
        %v2048 = vmul.f32 %v1519, %v476
        %v2049 = vmul.f32 %v1523, %v477
        %v2050 = vmul.f32 %v1527, %v478
        %v2051 = vmul.f32 %v1531, %v479
        %v2052 = vmul.f32 %v1535, %v480
        %v2053 = vmul.f32 %v1539, %v481
        %v2054 = vmul.f32 %v1546, %v482
        %v2055 = vmul.f32 %v1550, %v483
        %v2056 = vmul.f32 %v1554, %v484
        %v2057 = vmul.f32 %v1558, %v485
        %v2058 = vmul.f32 %v1562, %v486
        %v2059 = vmul.f32 %v1566, %v487
        %v2060 = vmul.f32 %v1570, %v488
        %v2061 = vmul.f32 %v1574, %v489
        %v2062 = vmul.f32 %v1581, %v490
        %v2063 = vmul.f32 %v1585, %v491
        %v2064 = vmul.f32 %v1589, %v492
        %v2065 = vmul.f32 %v1593, %v493
        %v2066 = vmul.f32 %v1597, %v494
        %v2067 = vmul.f32 %v1601, %v495
        %v2068 = vmul.f32 %v1605, %v496
        %v2069 = vmul.f32 %v1609, %v497
        %v2070 = vmul.f32 %v1616, %v499
        %v2071 = vmul.f32 %v1620, %v500
        %v2072 = vmul.f32 %v1624, %v501
        %v2073 = vmul.f32 %v1628, %v502
        %v2074 = vmul.f32 %v1632, %v503
        %v2075 = vmul.f32 %v1636, %v504
        %v2076 = vmul.f32 %v1640, %v505
        %v2077 = vmul.f32 %v1644, %v506
        %v2078 = vmul.f32 %v1651, %v507
        %v2079 = vmul.f32 %v1655, %v508
        %v2080 = vmul.f32 %v1659, %v509
        %v2081 = vmul.f32 %v1663, %v510
        %v2082 = vmul.f32 %v1667, %v511
        %v2083 = vmul.f32 %v1671, %v512
        %v2084 = vmul.f32 %v1675, %v513
        %v2085 = vmul.f32 %v1679, %v514
        %v2086 = vmul.f32 %v1686, %v515
        %v2087 = vmul.f32 %v1690, %v516
        %v2088 = vmul.f32 %v1694, %v517
        %v2089 = vmul.f32 %v1698, %v518
        %v2090 = vmul.f32 %v1702, %v519
        %v2091 = vmul.f32 %v1706, %v520
        %v2092 = vmul.f32 %v1710, %v521
        %v2093 = vmul.f32 %v1714, %v522
        %v2094 = vmul.f32 %v1721, %v523
        %v2095 = vmul.f32 %v1725, %v524
        %v2096 = vmul.f32 %v1729, %v525
        %v2097 = vmul.f32 %v1733, %v526
        %v2098 = vmul.f32 %v1737, %v527
        %v2099 = vmul.f32 %v1741, %v528
        %v2100 = vmul.f32 %v1745, %v529
        %v2101 = vmul.f32 %v1749, %v530
        %v2102 = vadd.f32 %v2038, %v2070
        %v2103 = vadd.f32 %v2039, %v2071
        %v2104 = vadd.f32 %v2040, %v2072
        %v2105 = vadd.f32 %v2041, %v2073
        %v2106 = vadd.f32 %v2042, %v2074
        %v2107 = vadd.f32 %v2043, %v2075
        %v2108 = vadd.f32 %v2044, %v2076
        %v2109 = vadd.f32 %v2045, %v2077
        %v2110 = vadd.f32 %v2046, %v2078
        %v2111 = vadd.f32 %v2047, %v2079
        %v2112 = vadd.f32 %v2048, %v2080
        %v2113 = vadd.f32 %v2049, %v2081
        %v2114 = vadd.f32 %v2050, %v2082
        %v2115 = vadd.f32 %v2051, %v2083
        %v2116 = vadd.f32 %v2052, %v2084
        %v2117 = vadd.f32 %v2053, %v2085
        %v2118 = vadd.f32 %v2054, %v2086
        %v2119 = vadd.f32 %v2055, %v2087
        %v2120 = vadd.f32 %v2056, %v2088
        %v2121 = vadd.f32 %v2057, %v2089
        %v2122 = vadd.f32 %v2058, %v2090
        %v2123 = vadd.f32 %v2059, %v2091
        %v2124 = vadd.f32 %v2060, %v2092
        %v2125 = vadd.f32 %v2061, %v2093
        %v2126 = vadd.f32 %v2062, %v2094
        %v2127 = vadd.f32 %v2063, %v2095
        %v2128 = vadd.f32 %v2064, %v2096
        %v2129 = vadd.f32 %v2065, %v2097
        %v2130 = vadd.f32 %v2066, %v2098
        %v2131 = vadd.f32 %v2067, %v2099
        %v2132 = vadd.f32 %v2068, %v2100
        %v2133 = vadd.f32 %v2069, %v2101
        %v2134 = vmul.f32 %v1757, %v466
        %v2135 = vmul.f32 %v1761, %v467
        %v2136 = vmul.f32 %v1765, %v468
        %v2137 = vmul.f32 %v1769, %v469
        %v2138 = vmul.f32 %v1773, %v470
        %v2139 = vmul.f32 %v1777, %v471
        %v2140 = vmul.f32 %v1781, %v472
        %v2141 = vmul.f32 %v1785, %v473
        %v2142 = vmul.f32 %v1793, %v474
        %v2143 = vmul.f32 %v1797, %v475
        %v2144 = vmul.f32 %v1801, %v476
        %v2145 = vmul.f32 %v1805, %v477
        %v2146 = vmul.f32 %v1809, %v478
        %v2147 = vmul.f32 %v1813, %v479
        %v2148 = vmul.f32 %v1817, %v480
        %v2149 = vmul.f32 %v1821, %v481
        %v2150 = vmul.f32 %v1829, %v482
        %v2151 = vmul.f32 %v1833, %v483
        %v2152 = vmul.f32 %v1837, %v484
        %v2153 = vmul.f32 %v1841, %v485
        %v2154 = vmul.f32 %v1845, %v486
        %v2155 = vmul.f32 %v1849, %v487
        %v2156 = vmul.f32 %v1853, %v488
        %v2157 = vmul.f32 %v1857, %v489
        %v2158 = vmul.f32 %v1865, %v490
        %v2159 = vmul.f32 %v1869, %v491
        %v2160 = vmul.f32 %v1873, %v492
        %v2161 = vmul.f32 %v1877, %v493
        %v2162 = vmul.f32 %v1881, %v494
        %v2163 = vmul.f32 %v1885, %v495
        %v2164 = vmul.f32 %v1889, %v496
        %v2165 = vmul.f32 %v1893, %v497
        %v2166 = vmul.f32 %v1901, %v499
        %v2167 = vmul.f32 %v1905, %v500
        %v2168 = vmul.f32 %v1909, %v501
        %v2169 = vmul.f32 %v1913, %v502
        %v2170 = vmul.f32 %v1917, %v503
        %v2171 = vmul.f32 %v1921, %v504
        %v2172 = vmul.f32 %v1925, %v505
        %v2173 = vmul.f32 %v1929, %v506
        %v2174 = vmul.f32 %v1937, %v507
        %v2175 = vmul.f32 %v1941, %v508
        %v2176 = vmul.f32 %v1945, %v509
        %v2177 = vmul.f32 %v1949, %v510
        %v2178 = vmul.f32 %v1953, %v511
        %v2179 = vmul.f32 %v1957, %v512
        %v2180 = vmul.f32 %v1961, %v513
        %v2181 = vmul.f32 %v1965, %v514
        %v2182 = vmul.f32 %v1973, %v515
        %v2183 = vmul.f32 %v1977, %v516
        %v2184 = vmul.f32 %v1981, %v517
        %v2185 = vmul.f32 %v1985, %v518
        %v2186 = vmul.f32 %v1989, %v519
        %v2187 = vmul.f32 %v1993, %v520
        %v2188 = vmul.f32 %v1997, %v521
        %v2189 = vmul.f32 %v2001, %v522
        %v2190 = vmul.f32 %v2009, %v523
        %v2191 = vmul.f32 %v2013, %v524
        %v2192 = vmul.f32 %v2017, %v525
        %v2193 = vmul.f32 %v2021, %v526
        %v2194 = vmul.f32 %v2025, %v527
        %v2195 = vmul.f32 %v2029, %v528
        %v2196 = vmul.f32 %v2033, %v529
        %v2197 = vmul.f32 %v2037, %v530
        %v2198 = vadd.f32 %v2134, %v2166
        %v2199 = vadd.f32 %v2135, %v2167
        %v2200 = vadd.f32 %v2136, %v2168
        %v2201 = vadd.f32 %v2137, %v2169
        %v2202 = vadd.f32 %v2138, %v2170
        %v2203 = vadd.f32 %v2139, %v2171
        %v2204 = vadd.f32 %v2140, %v2172
        %v2205 = vadd.f32 %v2141, %v2173
        %v2206 = vadd.f32 %v2142, %v2174
        %v2207 = vadd.f32 %v2143, %v2175
        %v2208 = vadd.f32 %v2144, %v2176
        %v2209 = vadd.f32 %v2145, %v2177
        %v2210 = vadd.f32 %v2146, %v2178
        %v2211 = vadd.f32 %v2147, %v2179
        %v2212 = vadd.f32 %v2148, %v2180
        %v2213 = vadd.f32 %v2149, %v2181
        %v2214 = vadd.f32 %v2150, %v2182
        %v2215 = vadd.f32 %v2151, %v2183
        %v2216 = vadd.f32 %v2152, %v2184
        %v2217 = vadd.f32 %v2153, %v2185
        %v2218 = vadd.f32 %v2154, %v2186
        %v2219 = vadd.f32 %v2155, %v2187
        %v2220 = vadd.f32 %v2156, %v2188
        %v2221 = vadd.f32 %v2157, %v2189
        %v2222 = vadd.f32 %v2158, %v2190
        %v2223 = vadd.f32 %v2159, %v2191
        %v2224 = vadd.f32 %v2160, %v2192
        %v2225 = vadd.f32 %v2161, %v2193
        %v2226 = vadd.f32 %v2162, %v2194
        %v2227 = vadd.f32 %v2163, %v2195
        %v2228 = vadd.f32 %v2164, %v2196
        %v2229 = vadd.f32 %v2165, %v2197
        %v2230 = vmax.f32 %v2198, 0.0
        %v2231 = vmax.f32 %v2199, 0.0
        %v2232 = vmax.f32 %v2200, 0.0
        %v2233 = vmax.f32 %v2201, 0.0
        %v2234 = vmax.f32 %v2202, 0.0
        %v2235 = vmax.f32 %v2203, 0.0
        %v2236 = vmax.f32 %v2204, 0.0
        %v2237 = vmax.f32 %v2205, 0.0
        %v2238 = vmax.f32 %v2206, 0.0
        %v2239 = vmax.f32 %v2207, 0.0
        %v2240 = vmax.f32 %v2208, 0.0
        %v2241 = vmax.f32 %v2209, 0.0
        %v2242 = vmax.f32 %v2210, 0.0
        %v2243 = vmax.f32 %v2211, 0.0
        %v2244 = vmax.f32 %v2212, 0.0
        %v2245 = vmax.f32 %v2213, 0.0
        %v2246 = vmax.f32 %v2214, 0.0
        %v2247 = vmax.f32 %v2215, 0.0
        %v2248 = vmax.f32 %v2216, 0.0
        %v2249 = vmax.f32 %v2217, 0.0
        %v2250 = vmax.f32 %v2218, 0.0
        %v2251 = vmax.f32 %v2219, 0.0
        %v2252 = vmax.f32 %v2220, 0.0
        %v2253 = vmax.f32 %v2221, 0.0
        %v2254 = vmax.f32 %v2222, 0.0
        %v2255 = vmax.f32 %v2223, 0.0
        %v2256 = vmax.f32 %v2224, 0.0
        %v2257 = vmax.f32 %v2225, 0.0
        %v2258 = vmax.f32 %v2226, 0.0
        %v2259 = vmax.f32 %v2227, 0.0
        %v2260 = vmax.f32 %v2228, 0.0
        %v2261 = vmax.f32 %v2229, 0.0
        %v2262 = vmul.f32 %v2102, %v2102
        %v2263 = vmul.f32 %v2103, %v2103
        %v2264 = vmul.f32 %v2104, %v2104
        %v2265 = vmul.f32 %v2105, %v2105
        %v2266 = vmul.f32 %v2106, %v2106
        %v2267 = vmul.f32 %v2107, %v2107
        %v2268 = vmul.f32 %v2108, %v2108
        %v2269 = vmul.f32 %v2109, %v2109
        %v2270 = vmul.f32 %v2110, %v2110
        %v2271 = vmul.f32 %v2111, %v2111
        %v2272 = vmul.f32 %v2112, %v2112
        %v2273 = vmul.f32 %v2113, %v2113
        %v2274 = vmul.f32 %v2114, %v2114
        %v2275 = vmul.f32 %v2115, %v2115
        %v2276 = vmul.f32 %v2116, %v2116
        %v2277 = vmul.f32 %v2117, %v2117
        %v2278 = vmul.f32 %v2118, %v2118
        %v2279 = vmul.f32 %v2119, %v2119
        %v2280 = vmul.f32 %v2120, %v2120
        %v2281 = vmul.f32 %v2121, %v2121
        %v2282 = vmul.f32 %v2122, %v2122
        %v2283 = vmul.f32 %v2123, %v2123
        %v2284 = vmul.f32 %v2124, %v2124
        %v2285 = vmul.f32 %v2125, %v2125
        %v2286 = vmul.f32 %v2126, %v2126
        %v2287 = vmul.f32 %v2127, %v2127
        %v2288 = vmul.f32 %v2128, %v2128
        %v2289 = vmul.f32 %v2129, %v2129
        %v2290 = vmul.f32 %v2130, %v2130
        %v2291 = vmul.f32 %v2131, %v2131
        %v2292 = vmul.f32 %v2132, %v2132
        %v2293 = vmul.f32 %v2133, %v2133
        %v2294 = vadd.f32 %v2262, %v2230
        %v2295 = vadd.f32 %v2263, %v2231
        %v2296 = vadd.f32 %v2264, %v2232
        %v2297 = vadd.f32 %v2265, %v2233
        %v2298 = vadd.f32 %v2266, %v2234
        %v2299 = vadd.f32 %v2267, %v2235
        %v2300 = vadd.f32 %v2268, %v2236
        %v2301 = vadd.f32 %v2269, %v2237
        %v2302 = vadd.f32 %v2270, %v2238
        %v2303 = vadd.f32 %v2271, %v2239
        %v2304 = vadd.f32 %v2272, %v2240
        %v2305 = vadd.f32 %v2273, %v2241
        %v2306 = vadd.f32 %v2274, %v2242
        %v2307 = vadd.f32 %v2275, %v2243
        %v2308 = vadd.f32 %v2276, %v2244
        %v2309 = vadd.f32 %v2277, %v2245
        %v2310 = vadd.f32 %v2278, %v2246
        %v2311 = vadd.f32 %v2279, %v2247
        %v2312 = vadd.f32 %v2280, %v2248
        %v2313 = vadd.f32 %v2281, %v2249
        %v2314 = vadd.f32 %v2282, %v2250
        %v2315 = vadd.f32 %v2283, %v2251
        %v2316 = vadd.f32 %v2284, %v2252
        %v2317 = vadd.f32 %v2285, %v2253
        %v2318 = vadd.f32 %v2286, %v2254
        %v2319 = vadd.f32 %v2287, %v2255
        %v2320 = vadd.f32 %v2288, %v2256
        %v2321 = vadd.f32 %v2289, %v2257
        %v2322 = vadd.f32 %v2290, %v2258
        %v2323 = vadd.f32 %v2291, %v2259
        %v2324 = vadd.f32 %v2292, %v2260
        %v2325 = vadd.f32 %v2293, %v2261
        %2326 = vst [vmem:[%s453] sm:$0xff] %v2294
        %2327 = vst [vmem:[%s453 + $0x8] sm:$0xff] %v2295
        %2328 = vst [vmem:[%s453 + $0x10] sm:$0xff] %v2296
        %2329 = vst [vmem:[%s453 + $0x18] sm:$0xff] %v2297
        %2330 = vst [vmem:[%s453 + $0x20] sm:$0xff] %v2298
        %2331 = vst [vmem:[%s453 + $0x28] sm:$0xff] %v2299
        %2332 = vst [vmem:[%s453 + $0x30] sm:$0xff] %v2300
        %2333 = vst [vmem:[%s453 + $0x38] sm:$0xff] %v2301
        %2334 = vst [vmem:[%s453 + $0x40] sm:$0xff] %v2302
        %2335 = vst [vmem:[%s453 + $0x48] sm:$0xff] %v2303
        %2336 = vst [vmem:[%s453 + $0x50] sm:$0xff] %v2304
        %2337 = vst [vmem:[%s453 + $0x58] sm:$0xff] %v2305
        %2338 = vst [vmem:[%s453 + $0x60] sm:$0xff] %v2306
        %2339 = vst [vmem:[%s453 + $0x68] sm:$0xff] %v2307
        %2340 = vst [vmem:[%s453 + $0x70] sm:$0xff] %v2308
        %2341 = vst [vmem:[%s453 + $0x78] sm:$0xff] %v2309
        %2342 = vst [vmem:[%s453 + $0x80] sm:$0xff] %v2310
        %2343 = vst [vmem:[%s453 + $0x88] sm:$0xff] %v2311
        %2344 = vst [vmem:[%s453 + $0x90] sm:$0xff] %v2312
        %2345 = vst [vmem:[%s453 + $0x98] sm:$0xff] %v2313
        %2346 = vst [vmem:[%s453 + $0xa0] sm:$0xff] %v2314
        %2347 = vst [vmem:[%s453 + $0xa8] sm:$0xff] %v2315
        %2348 = vst [vmem:[%s453 + $0xb0] sm:$0xff] %v2316
        %2349 = vst [vmem:[%s453 + $0xb8] sm:$0xff] %v2317
        %2350 = vst [vmem:[%s453 + $0xc0] sm:$0xff] %v2318
        %2351 = vst [vmem:[%s453 + $0xc8] sm:$0xff] %v2319
        %2352 = vst [vmem:[%s453 + $0xd0] sm:$0xff] %v2320
        %2353 = vst [vmem:[%s453 + $0xd8] sm:$0xff] %v2321
        %2354 = vst [vmem:[%s453 + $0xe0] sm:$0xff] %v2322
        %2355 = vst [vmem:[%s453 + $0xe8] sm:$0xff] %v2323
        %2356 = vst [vmem:[%s453 + $0xf0] sm:$0xff] %v2324
        %2357 = vst [vmem:[%s453 + $0xf8] sm:$0xff] %v2325
        %2358 = vadd.xlane.f32.xlu0 %v2294
        %v2359 = vpop.xlane.xlu0 %2358
        %2360 = vadd.xlane.f32.xlu0 %v2295
        %v2361 = vpop.xlane.xlu0 %2360
        %2362 = vadd.xlane.f32.xlu0 %v2296
        %v2363 = vpop.xlane.xlu0 %2362
        %2364 = vadd.xlane.f32.xlu0 %v2297
        %v2365 = vpop.xlane.xlu0 %2364
        %2366 = vadd.xlane.f32.xlu0 %v2298
        %v2367 = vpop.xlane.xlu0 %2366
        %2368 = vadd.xlane.f32.xlu0 %v2299
        %v2369 = vpop.xlane.xlu0 %2368
        %2370 = vadd.xlane.f32.xlu0 %v2300
        %v2371 = vpop.xlane.xlu0 %2370
        %2372 = vadd.xlane.f32.xlu0 %v2301
        %v2373 = vpop.xlane.xlu0 %2372
        %2374 = vadd.xlane.f32.xlu0 %v2302
        %v2375 = vpop.xlane.xlu0 %2374
        %2376 = vadd.xlane.f32.xlu0 %v2303
        %v2377 = vpop.xlane.xlu0 %2376
        %2378 = vadd.xlane.f32.xlu0 %v2304
        %v2379 = vpop.xlane.xlu0 %2378
        %2380 = vadd.xlane.f32.xlu0 %v2305
        %v2381 = vpop.xlane.xlu0 %2380
        %2382 = vadd.xlane.f32.xlu0 %v2306
        %v2383 = vpop.xlane.xlu0 %2382
        %2384 = vadd.xlane.f32.xlu0 %v2307
        %v2385 = vpop.xlane.xlu0 %2384
        %2386 = vadd.xlane.f32.xlu0 %v2308
        %v2387 = vpop.xlane.xlu0 %2386
        %2388 = vadd.xlane.f32.xlu0 %v2309
        %v2389 = vpop.xlane.xlu0 %2388
        %2390 = vadd.xlane.f32.xlu0 %v2310
        %v2391 = vpop.xlane.xlu0 %2390
        %2392 = vadd.xlane.f32.xlu0 %v2311
        %v2393 = vpop.xlane.xlu0 %2392
        %2394 = vadd.xlane.f32.xlu0 %v2312
        %v2395 = vpop.xlane.xlu0 %2394
        %2396 = vadd.xlane.f32.xlu0 %v2313
        %v2397 = vpop.xlane.xlu0 %2396
        %2398 = vadd.xlane.f32.xlu0 %v2314
        %v2399 = vpop.xlane.xlu0 %2398
        %2400 = vadd.xlane.f32.xlu0 %v2315
        %v2401 = vpop.xlane.xlu0 %2400
        %2402 = vadd.xlane.f32.xlu0 %v2316
        %v2403 = vpop.xlane.xlu0 %2402
        %2404 = vadd.xlane.f32.xlu0 %v2317
        %v2405 = vpop.xlane.xlu0 %2404
        %2406 = vadd.xlane.f32.xlu0 %v2318
        %v2407 = vpop.xlane.xlu0 %2406
        %2408 = vadd.xlane.f32.xlu0 %v2319
        %v2409 = vpop.xlane.xlu0 %2408
        %2410 = vadd.xlane.f32.xlu0 %v2320
        %v2411 = vpop.xlane.xlu0 %2410
        %2412 = vadd.xlane.f32.xlu0 %v2321
        %v2413 = vpop.xlane.xlu0 %2412
        %2414 = vadd.xlane.f32.xlu0 %v2322
        %v2415 = vpop.xlane.xlu0 %2414
        %2416 = vadd.xlane.f32.xlu0 %v2323
        %v2417 = vpop.xlane.xlu0 %2416
        %2418 = vadd.xlane.f32.xlu0 %v2324
        %v2419 = vpop.xlane.xlu0 %2418
        %2420 = vadd.xlane.f32.xlu0 %v2325
        %v2421 = vpop.xlane.xlu0 %2420
        %v2422 = vmul.f32 %v2359, 0.0078125
        %v2423 = vmul.f32 %v2361, 0.0078125
        %v2424 = vmul.f32 %v2363, 0.0078125
        %v2425 = vmul.f32 %v2365, 0.0078125
        %v2426 = vmul.f32 %v2367, 0.0078125
        %v2427 = vmul.f32 %v2369, 0.0078125
        %v2428 = vmul.f32 %v2371, 0.0078125
        %v2429 = vmul.f32 %v2373, 0.0078125
        %v2430 = vmul.f32 %v2375, 0.0078125
        %v2431 = vmul.f32 %v2377, 0.0078125
        %v2432 = vmul.f32 %v2379, 0.0078125
        %v2433 = vmul.f32 %v2381, 0.0078125
        %v2434 = vmul.f32 %v2383, 0.0078125
        %v2435 = vmul.f32 %v2385, 0.0078125
        %v2436 = vmul.f32 %v2387, 0.0078125
        %v2437 = vmul.f32 %v2389, 0.0078125
        %v2438 = vmul.f32 %v2391, 0.0078125
        %v2439 = vmul.f32 %v2393, 0.0078125
        %v2440 = vmul.f32 %v2395, 0.0078125
        %v2441 = vmul.f32 %v2397, 0.0078125
        %v2442 = vmul.f32 %v2399, 0.0078125
        %v2443 = vmul.f32 %v2401, 0.0078125
        %v2444 = vmul.f32 %v2403, 0.0078125
        %v2445 = vmul.f32 %v2405, 0.0078125
        %v2446 = vmul.f32 %v2407, 0.0078125
        %v2447 = vmul.f32 %v2409, 0.0078125
        %v2448 = vmul.f32 %v2411, 0.0078125
        %v2449 = vmul.f32 %v2413, 0.0078125
        %v2450 = vmul.f32 %v2415, 0.0078125
        %v2451 = vmul.f32 %v2417, 0.0078125
        %v2452 = vmul.f32 %v2419, 0.0078125
        %v2453 = vmul.f32 %v2421, 0.0078125
        %v2486 = vlaneseq
        %v2487 = vshrl.u32 %v2486, 7
        %v2488 = vsub.s32 %v756, %v2487
        %v2489 = vrot.slane %v2422, %v2488
        %v2490 = vlaneseq
        %v2491 = vshrl.u32 %v2490, 7
        %v2492 = vsub.s32 %v761, %v2491
        %v2493 = vrot.slane %v2423, %v2492
        %v2494 = vsel %vm766, %v2493, %v2489
        %v2495 = vlaneseq
        %v2496 = vshrl.u32 %v2495, 7
        %v2497 = vsub.s32 %v768, %v2496
        %v2498 = vrot.slane %v2424, %v2497
        %v2499 = vsel %vm773, %v2498, %v2494
        %v2500 = vlaneseq
        %v2501 = vshrl.u32 %v2500, 7
        %v2502 = vsub.s32 %v775, %v2501
        %v2503 = vrot.slane %v2425, %v2502
        %v2504 = vsel %vm780, %v2503, %v2499
        %v2505 = vlaneseq
        %v2506 = vshrl.u32 %v2505, 7
        %v2507 = vsub.s32 %v782, %v2506
        %v2508 = vrot.slane %v2426, %v2507
        %v2509 = vsel %vm787, %v2508, %v2504
        %v2510 = vlaneseq
        %v2511 = vshrl.u32 %v2510, 7
        %v2512 = vsub.s32 %v789, %v2511
        %v2513 = vrot.slane %v2427, %v2512
        %v2514 = vsel %vm794, %v2513, %v2509
        %v2515 = vlaneseq
        %v2516 = vshrl.u32 %v2515, 7
        %v2517 = vsub.s32 %v796, %v2516
        %v2518 = vrot.slane %v2428, %v2517
        %v2519 = vsel %vm801, %v2518, %v2514
        %v2520 = vlaneseq
        %v2521 = vshrl.u32 %v2520, 7
        %v2522 = vsub.s32 %v803, %v2521
        %v2523 = vrot.slane %v2429, %v2522
        %v2524 = vsel %vm808, %v2523, %v2519
        %v2525 = vlaneseq
        %v2526 = vshrl.u32 %v2525, 7
        %v2527 = vsub.s32 %v756, %v2526
        %v2528 = vrot.slane %v2430, %v2527
        %v2529 = vlaneseq
        %v2530 = vshrl.u32 %v2529, 7
        %v2531 = vsub.s32 %v761, %v2530
        %v2532 = vrot.slane %v2431, %v2531
        %v2533 = vsel %vm766, %v2532, %v2528
        %v2534 = vlaneseq
        %v2535 = vshrl.u32 %v2534, 7
        %v2536 = vsub.s32 %v768, %v2535
        %v2537 = vrot.slane %v2432, %v2536
        %v2538 = vsel %vm773, %v2537, %v2533
        %v2539 = vlaneseq
        %v2540 = vshrl.u32 %v2539, 7
        %v2541 = vsub.s32 %v775, %v2540
        %v2542 = vrot.slane %v2433, %v2541
        %v2543 = vsel %vm780, %v2542, %v2538
        %v2544 = vlaneseq
        %v2545 = vshrl.u32 %v2544, 7
        %v2546 = vsub.s32 %v782, %v2545
        %v2547 = vrot.slane %v2434, %v2546
        %v2548 = vsel %vm787, %v2547, %v2543
        %v2549 = vlaneseq
        %v2550 = vshrl.u32 %v2549, 7
        %v2551 = vsub.s32 %v789, %v2550
        %v2552 = vrot.slane %v2435, %v2551
        %v2553 = vsel %vm794, %v2552, %v2548
        %v2554 = vlaneseq
        %v2555 = vshrl.u32 %v2554, 7
        %v2556 = vsub.s32 %v796, %v2555
        %v2557 = vrot.slane %v2436, %v2556
        %v2558 = vsel %vm801, %v2557, %v2553
        %v2559 = vlaneseq
        %v2560 = vshrl.u32 %v2559, 7
        %v2561 = vsub.s32 %v803, %v2560
        %v2562 = vrot.slane %v2437, %v2561
        %v2563 = vsel %vm808, %v2562, %v2558
        %v2564 = vlaneseq
        %v2565 = vshrl.u32 %v2564, 7
        %v2566 = vsub.s32 %v756, %v2565
        %v2567 = vrot.slane %v2438, %v2566
        %v2568 = vlaneseq
        %v2569 = vshrl.u32 %v2568, 7
        %v2570 = vsub.s32 %v761, %v2569
        %v2571 = vrot.slane %v2439, %v2570
        %v2572 = vsel %vm766, %v2571, %v2567
        %v2573 = vlaneseq
        %v2574 = vshrl.u32 %v2573, 7
        %v2575 = vsub.s32 %v768, %v2574
        %v2576 = vrot.slane %v2440, %v2575
        %v2577 = vsel %vm773, %v2576, %v2572
        %v2578 = vlaneseq
        %v2579 = vshrl.u32 %v2578, 7
        %v2580 = vsub.s32 %v775, %v2579
        %v2581 = vrot.slane %v2441, %v2580
        %v2582 = vsel %vm780, %v2581, %v2577
        %v2583 = vlaneseq
        %v2584 = vshrl.u32 %v2583, 7
        %v2585 = vsub.s32 %v782, %v2584
        %v2586 = vrot.slane %v2442, %v2585
        %v2587 = vsel %vm787, %v2586, %v2582
        %v2588 = vlaneseq
        %v2589 = vshrl.u32 %v2588, 7
        %v2590 = vsub.s32 %v789, %v2589
        %v2591 = vrot.slane %v2443, %v2590
        %v2592 = vsel %vm794, %v2591, %v2587
        %v2593 = vlaneseq
        %v2594 = vshrl.u32 %v2593, 7
        %v2595 = vsub.s32 %v796, %v2594
        %v2596 = vrot.slane %v2444, %v2595
        %v2597 = vsel %vm801, %v2596, %v2592
        %v2598 = vlaneseq
        %v2599 = vshrl.u32 %v2598, 7
        %v2600 = vsub.s32 %v803, %v2599
        %v2601 = vrot.slane %v2445, %v2600
        %v2602 = vsel %vm808, %v2601, %v2597
        %v2603 = vlaneseq
        %v2604 = vshrl.u32 %v2603, 7
        %v2605 = vsub.s32 %v756, %v2604
        %v2606 = vrot.slane %v2446, %v2605
        %v2607 = vlaneseq
        %v2608 = vshrl.u32 %v2607, 7
        %v2609 = vsub.s32 %v761, %v2608
        %v2610 = vrot.slane %v2447, %v2609
        %v2611 = vsel %vm766, %v2610, %v2606
        %v2612 = vlaneseq
        %v2613 = vshrl.u32 %v2612, 7
        %v2614 = vsub.s32 %v768, %v2613
        %v2615 = vrot.slane %v2448, %v2614
        %v2616 = vsel %vm773, %v2615, %v2611
        %v2617 = vlaneseq
        %v2618 = vshrl.u32 %v2617, 7
        %v2619 = vsub.s32 %v775, %v2618
        %v2620 = vrot.slane %v2449, %v2619
        %v2621 = vsel %vm780, %v2620, %v2616
        %v2622 = vlaneseq
        %v2623 = vshrl.u32 %v2622, 7
        %v2624 = vsub.s32 %v782, %v2623
        %v2625 = vrot.slane %v2450, %v2624
        %v2626 = vsel %vm787, %v2625, %v2621
        %v2627 = vlaneseq
        %v2628 = vshrl.u32 %v2627, 7
        %v2629 = vsub.s32 %v789, %v2628
        %v2630 = vrot.slane %v2451, %v2629
        %v2631 = vsel %vm794, %v2630, %v2626
        %v2632 = vlaneseq
        %v2633 = vshrl.u32 %v2632, 7
        %v2634 = vsub.s32 %v796, %v2633
        %v2635 = vrot.slane %v2452, %v2634
        %v2636 = vsel %vm801, %v2635, %v2631
        %v2637 = vlaneseq
        %v2638 = vshrl.u32 %v2637, 7
        %v2639 = vsub.s32 %v803, %v2638
        %v2640 = vrot.slane %v2453, %v2639
        %v2641 = vsel %vm808, %v2640, %v2636
        %v2642 = vsel %vm927, %v2563, %v2524
        %v2643 = vsel %vm927, %v2641, %v2602
        %v2646 = vcombine.low %v2642, %v2643
        %v2648 = vunpack.c.l.s4 1934713408
        %v2649 = vunpack.c.0.s8 %v2648
        %v2650 = vlaneseq
        %v2651 = vshrl.u32 %v2650, 7
        %v2652 = vsub.s32 %v2649, %v2651
        %v2653 = vrot.slane %v2646, %v2652
        %v2654 = vcombine.high %v2653, 0.0
        %2656 = vrot.lane.b32.xlu0 %v2654, 64
        %v2657 = vpop.permute.xlu0 %2656
        %v2659 = vsel %vm1151, %v2653, %v2657
        %2660 = vst [vmem:[%s465] sm:$0x3] %v2659
        %s2661 = sand.u32 %s70, 1
        %s2662 = sand.u32 %s70, 1
        %s2663 = smul.addr %s2662, 256
        %s2664 = scalar_lea.vmem [#allocation3], %s2663
        %p2665 = scmp.lt.s32.totalorder %s15, 1
        %s2666 = scalar_select %p2665, %s15, 1
        %s2667 = smul.addr %s2666, 2
        %s2668 = scalar_lea.vmem %s3, %s2667
        // Predicated region
        $region67: #{aatm_forward.1} parent=61 // pred_check
          %p2669 = pneg %p80
        $region68: #{aatm_forward.1} parent=61 // pred_check_branch
          %2671 = sbr.rel (%p2669) target = $region70
        $region69: #{aatm_forward.1} parent=61 // pred_region
          %s2672 = smul.u32 2, %s15
          %s2673 = smul.addr %s2672, 8
          %s2674 = smul.addr %s2673, 8
          %s2675 = scalar_lea.vmem %s2, %s2674
          // Predicated region
          $region71: #{aatm_forward.1} parent=69 // pred_check
            _
          $region72: #{aatm_forward.1} parent=69 // pred_check_branch
            %2677 = sbr.rel (0) target = $region74
          $region73: #{aatm_forward.1} parent=69 // pred_region
            // Predicated region
            $region75: #{aatm_forward.1} parent=73 // pred_check
              _
            $region76: #{aatm_forward.1} parent=73 // pred_check_branch
              %2679 = sbr.rel (0) target = $region78
            $region77: #{aatm_forward.1} parent=73 // pred_region
              // Predicated region
              $region90: #{aatm_forward.1} parent=77 // pred_check
                _
              $region91: #{aatm_forward.1} parent=77 // pred_check_branch
                %2756 = sbr.rel (0) target = $region93
              $region92: #{aatm_forward.1} parent=77 // pred_region
                loop: start=0, step=1, limit=1
                $region94: #{aatm_forward.1} parent=92 // loop_pre_header
                  _
                $region95: #{aatm_forward.1} parent=92 // loop_header
                  %s2758 = sphi 0, %s2762
                  %p2759 = scmp.ge.s32.totalorder %s2758, 1
                  %s2763 = sphi %s2664, %s2664
                  %s2764 = sphi %s2675, %s2675
                $region96: #{aatm_forward.1} parent=92 // loop_header_branch
                  %2761 = sbr.rel (%p2759) target = $region100
                $region97: #{aatm_forward.1} parent=92 // loop_body
                  %v2765 = vld [vmem:[%s2763] sm:$0xff]
                  %2766 = vst [vmem:[%s2764] sm:$0xff] %v2765
                  %v2767 = vld [vmem:[%s2763 + $0x8] sm:$0xff]
                  %2768 = vst [vmem:[%s2764 + $0x8] sm:$0xff] %v2767
                  %v2769 = vld [vmem:[%s2763 + $0x10] sm:$0xff]
                  %2770 = vst [vmem:[%s2764 + $0x10] sm:$0xff] %v2769
                  %v2771 = vld [vmem:[%s2763 + $0x18] sm:$0xff]
                  %2772 = vst [vmem:[%s2764 + $0x18] sm:$0xff] %v2771
                  %v2773 = vld [vmem:[%s2763 + $0x20] sm:$0xff]
                  %2774 = vst [vmem:[%s2764 + $0x20] sm:$0xff] %v2773
                  %v2775 = vld [vmem:[%s2763 + $0x28] sm:$0xff]
                  %2776 = vst [vmem:[%s2764 + $0x28] sm:$0xff] %v2775
                  %v2777 = vld [vmem:[%s2763 + $0x30] sm:$0xff]
                  %2778 = vst [vmem:[%s2764 + $0x30] sm:$0xff] %v2777
                  %v2779 = vld [vmem:[%s2763 + $0x38] sm:$0xff]
                  %2780 = vst [vmem:[%s2764 + $0x38] sm:$0xff] %v2779
                  %v2781 = vld [vmem:[%s2763 + $0x40] sm:$0xff]
                  %2782 = vst [vmem:[%s2764 + $0x40] sm:$0xff] %v2781
                  %v2783 = vld [vmem:[%s2763 + $0x48] sm:$0xff]
                  %2784 = vst [vmem:[%s2764 + $0x48] sm:$0xff] %v2783
                  %v2785 = vld [vmem:[%s2763 + $0x50] sm:$0xff]
                  %2786 = vst [vmem:[%s2764 + $0x50] sm:$0xff] %v2785
                  %v2787 = vld [vmem:[%s2763 + $0x58] sm:$0xff]
                  %2788 = vst [vmem:[%s2764 + $0x58] sm:$0xff] %v2787
                  %v2789 = vld [vmem:[%s2763 + $0x60] sm:$0xff]
                  %2790 = vst [vmem:[%s2764 + $0x60] sm:$0xff] %v2789
                  %v2791 = vld [vmem:[%s2763 + $0x68] sm:$0xff]
                  %2792 = vst [vmem:[%s2764 + $0x68] sm:$0xff] %v2791
                  %v2793 = vld [vmem:[%s2763 + $0x70] sm:$0xff]
                  %2794 = vst [vmem:[%s2764 + $0x70] sm:$0xff] %v2793
                  %v2795 = vld [vmem:[%s2763 + $0x78] sm:$0xff]
                  %2796 = vst [vmem:[%s2764 + $0x78] sm:$0xff] %v2795
                  %v2797 = vld [vmem:[%s2763 + $0x80] sm:$0xff]
                  %2798 = vst [vmem:[%s2764 + $0x100] sm:$0xff] %v2797
                  %v2799 = vld [vmem:[%s2763 + $0x88] sm:$0xff]
                  %2800 = vst [vmem:[%s2764 + $0x108] sm:$0xff] %v2799
                  %v2801 = vld [vmem:[%s2763 + $0x90] sm:$0xff]
                  %2802 = vst [vmem:[%s2764 + $0x110] sm:$0xff] %v2801
                  %v2803 = vld [vmem:[%s2763 + $0x98] sm:$0xff]
                  %2804 = vst [vmem:[%s2764 + $0x118] sm:$0xff] %v2803
                  %v2805 = vld [vmem:[%s2763 + $0xa0] sm:$0xff]
                  %2806 = vst [vmem:[%s2764 + $0x120] sm:$0xff] %v2805
                  %v2807 = vld [vmem:[%s2763 + $0xa8] sm:$0xff]
                  %2808 = vst [vmem:[%s2764 + $0x128] sm:$0xff] %v2807
                  %v2809 = vld [vmem:[%s2763 + $0xb0] sm:$0xff]
                  %2810 = vst [vmem:[%s2764 + $0x130] sm:$0xff] %v2809
                  %v2811 = vld [vmem:[%s2763 + $0xb8] sm:$0xff]
                  %2812 = vst [vmem:[%s2764 + $0x138] sm:$0xff] %v2811
                  %v2813 = vld [vmem:[%s2763 + $0xc0] sm:$0xff]
                  %2814 = vst [vmem:[%s2764 + $0x140] sm:$0xff] %v2813
                  %v2815 = vld [vmem:[%s2763 + $0xc8] sm:$0xff]
                  %2816 = vst [vmem:[%s2764 + $0x148] sm:$0xff] %v2815
                  %v2817 = vld [vmem:[%s2763 + $0xd0] sm:$0xff]
                  %2818 = vst [vmem:[%s2764 + $0x150] sm:$0xff] %v2817
                  %v2819 = vld [vmem:[%s2763 + $0xd8] sm:$0xff]
                  %2820 = vst [vmem:[%s2764 + $0x158] sm:$0xff] %v2819
                  %v2821 = vld [vmem:[%s2763 + $0xe0] sm:$0xff]
                  %2822 = vst [vmem:[%s2764 + $0x160] sm:$0xff] %v2821
                  %v2823 = vld [vmem:[%s2763 + $0xe8] sm:$0xff]
                  %2824 = vst [vmem:[%s2764 + $0x168] sm:$0xff] %v2823
                  %v2825 = vld [vmem:[%s2763 + $0xf0] sm:$0xff]
                  %2826 = vst [vmem:[%s2764 + $0x170] sm:$0xff] %v2825
                  %v2827 = vld [vmem:[%s2763 + $0xf8] sm:$0xff]
                  %2828 = vst [vmem:[%s2764 + $0x178] sm:$0xff] %v2827
                $region98: #{aatm_forward.1} parent=92 // loop_footer
                  %s2762 = sadd.s32 1, %s2758
                $region99: #{aatm_forward.1} parent=92 // loop_footer_branch
                  %2757 = sbr.rel target = $region95
                $region100: #{aatm_forward.1} parent=92 // loop_exit
                  _
              $region93: #{aatm_forward.1} parent=77 // pred_fallthru
                _
              // Predicated region
              $region101: #{aatm_forward.1} parent=77 // pred_check
                _
              $region102: #{aatm_forward.1} parent=77 // pred_check_branch
                %2830 = sbr.rel target = $region104
              $region103: #{aatm_forward.1} parent=77 // pred_region
                _
              $region104: #{aatm_forward.1} parent=77 // pred_fallthru
                _
            $region78: #{aatm_forward.1} parent=73 // pred_fallthru
              _
            // Predicated region
            $region79: #{aatm_forward.1} parent=73 // pred_check
              _
            $region80: #{aatm_forward.1} parent=73 // pred_check_branch
              %2681 = sbr.rel target = $region82
            $region81: #{aatm_forward.1} parent=73 // pred_region
              loop: start=0, step=1, limit=1
              $region83: #{aatm_forward.1} parent=81 // loop_pre_header
                _
              $region84: #{aatm_forward.1} parent=81 // loop_header
                %s2684 = sphi 0, %s2688
                %p2685 = scmp.ge.s32.totalorder %s2684, 1
                %s2689 = sphi %s2664, %s2664
                %s2690 = sphi %s2675, %s2675
              $region85: #{aatm_forward.1} parent=81 // loop_header_branch
                %2687 = sbr.rel (%p2685) target = $region89
              $region86: #{aatm_forward.1} parent=81 // loop_body
                %v2691 = vld [vmem:[%s2689] sm:$0xff]
                %2692 = vst [vmem:[%s2690] sm:$0xff] %v2691
                %v2693 = vld [vmem:[%s2689 + $0x8] sm:$0xff]
                %2694 = vst [vmem:[%s2690 + $0x8] sm:$0xff] %v2693
                %v2695 = vld [vmem:[%s2689 + $0x10] sm:$0xff]
                %2696 = vst [vmem:[%s2690 + $0x10] sm:$0xff] %v2695
                %v2697 = vld [vmem:[%s2689 + $0x18] sm:$0xff]
                %2698 = vst [vmem:[%s2690 + $0x18] sm:$0xff] %v2697
                %v2699 = vld [vmem:[%s2689 + $0x20] sm:$0xff]
                %2700 = vst [vmem:[%s2690 + $0x20] sm:$0xff] %v2699
                %v2701 = vld [vmem:[%s2689 + $0x28] sm:$0xff]
                %2702 = vst [vmem:[%s2690 + $0x28] sm:$0xff] %v2701
                %v2703 = vld [vmem:[%s2689 + $0x30] sm:$0xff]
                %2704 = vst [vmem:[%s2690 + $0x30] sm:$0xff] %v2703
                %v2705 = vld [vmem:[%s2689 + $0x38] sm:$0xff]
                %2706 = vst [vmem:[%s2690 + $0x38] sm:$0xff] %v2705
                %v2707 = vld [vmem:[%s2689 + $0x40] sm:$0xff]
                %2708 = vst [vmem:[%s2690 + $0x40] sm:$0xff] %v2707
                %v2709 = vld [vmem:[%s2689 + $0x48] sm:$0xff]
                %2710 = vst [vmem:[%s2690 + $0x48] sm:$0xff] %v2709
                %v2711 = vld [vmem:[%s2689 + $0x50] sm:$0xff]
                %2712 = vst [vmem:[%s2690 + $0x50] sm:$0xff] %v2711
                %v2713 = vld [vmem:[%s2689 + $0x58] sm:$0xff]
                %2714 = vst [vmem:[%s2690 + $0x58] sm:$0xff] %v2713
                %v2715 = vld [vmem:[%s2689 + $0x60] sm:$0xff]
                %2716 = vst [vmem:[%s2690 + $0x60] sm:$0xff] %v2715
                %v2717 = vld [vmem:[%s2689 + $0x68] sm:$0xff]
                %2718 = vst [vmem:[%s2690 + $0x68] sm:$0xff] %v2717
                %v2719 = vld [vmem:[%s2689 + $0x70] sm:$0xff]
                %2720 = vst [vmem:[%s2690 + $0x70] sm:$0xff] %v2719
                %v2721 = vld [vmem:[%s2689 + $0x78] sm:$0xff]
                %2722 = vst [vmem:[%s2690 + $0x78] sm:$0xff] %v2721
                %v2723 = vld [vmem:[%s2689 + $0x80] sm:$0xff]
                %2724 = vst [vmem:[%s2690 + $0x100] sm:$0xff] %v2723
                %v2725 = vld [vmem:[%s2689 + $0x88] sm:$0xff]
                %2726 = vst [vmem:[%s2690 + $0x108] sm:$0xff] %v2725
                %v2727 = vld [vmem:[%s2689 + $0x90] sm:$0xff]
                %2728 = vst [vmem:[%s2690 + $0x110] sm:$0xff] %v2727
                %v2729 = vld [vmem:[%s2689 + $0x98] sm:$0xff]
                %2730 = vst [vmem:[%s2690 + $0x118] sm:$0xff] %v2729
                %v2731 = vld [vmem:[%s2689 + $0xa0] sm:$0xff]
                %2732 = vst [vmem:[%s2690 + $0x120] sm:$0xff] %v2731
                %v2733 = vld [vmem:[%s2689 + $0xa8] sm:$0xff]
                %2734 = vst [vmem:[%s2690 + $0x128] sm:$0xff] %v2733
                %v2735 = vld [vmem:[%s2689 + $0xb0] sm:$0xff]
                %2736 = vst [vmem:[%s2690 + $0x130] sm:$0xff] %v2735
                %v2737 = vld [vmem:[%s2689 + $0xb8] sm:$0xff]
                %2738 = vst [vmem:[%s2690 + $0x138] sm:$0xff] %v2737
                %v2739 = vld [vmem:[%s2689 + $0xc0] sm:$0xff]
                %2740 = vst [vmem:[%s2690 + $0x140] sm:$0xff] %v2739
                %v2741 = vld [vmem:[%s2689 + $0xc8] sm:$0xff]
                %2742 = vst [vmem:[%s2690 + $0x148] sm:$0xff] %v2741
                %v2743 = vld [vmem:[%s2689 + $0xd0] sm:$0xff]
                %2744 = vst [vmem:[%s2690 + $0x150] sm:$0xff] %v2743
                %v2745 = vld [vmem:[%s2689 + $0xd8] sm:$0xff]
                %2746 = vst [vmem:[%s2690 + $0x158] sm:$0xff] %v2745
                %v2747 = vld [vmem:[%s2689 + $0xe0] sm:$0xff]
                %2748 = vst [vmem:[%s2690 + $0x160] sm:$0xff] %v2747
                %v2749 = vld [vmem:[%s2689 + $0xe8] sm:$0xff]
                %2750 = vst [vmem:[%s2690 + $0x168] sm:$0xff] %v2749
                %v2751 = vld [vmem:[%s2689 + $0xf0] sm:$0xff]
                %2752 = vst [vmem:[%s2690 + $0x170] sm:$0xff] %v2751
                %v2753 = vld [vmem:[%s2689 + $0xf8] sm:$0xff]
                %2754 = vst [vmem:[%s2690 + $0x178] sm:$0xff] %v2753
              $region87: #{aatm_forward.1} parent=81 // loop_footer
                %s2688 = sadd.s32 1, %s2684
              $region88: #{aatm_forward.1} parent=81 // loop_footer_branch
                %2683 = sbr.rel target = $region84
              $region89: #{aatm_forward.1} parent=81 // loop_exit
                _
            $region82: #{aatm_forward.1} parent=73 // pred_fallthru
              _
          $region74: #{aatm_forward.1} parent=69 // pred_fallthru
            _
          %2831 = vnop
        $region70: #{aatm_forward.1} parent=61 // pred_fallthru
          _
        // Predicated region
        $region105: #{aatm_forward.1} parent=61 // pred_check
          %p2832 = pneg %p106
        $region106: #{aatm_forward.1} parent=61 // pred_check_branch
          %2834 = sbr.rel (%p2832) target = $region108
        $region107: #{aatm_forward.1} parent=61 // pred_region
          _
        $region108: #{aatm_forward.1} parent=61 // pred_fallthru
          _
      $region62: #{aatm_forward.1} parent=5 // pred_fallthru
        _
      %p2835 = scmp.le.s32.totalorder 2, %s10
      // Predicated region
      $region109: #{aatm_forward.1} parent=5 // pred_check
        %p2836 = pneg %p2835
      $region110: #{aatm_forward.1} parent=5 // pred_check_branch
        %2838 = sbr.rel (%p2836) target = $region112
      $region111: #{aatm_forward.1} parent=5 // pred_region
        %s2839 = ssub.s32 %s10, 2
        // Predicated region
        $region113: #{aatm_forward.1} parent=111 // pred_check
          %p2840 = pneg %p86
        $region114: #{aatm_forward.1} parent=111 // pred_check_branch
          %2842 = sbr.rel (%p2840) target = $region116
        $region115: #{aatm_forward.1} parent=111 // pred_region
          %s2843 = sand.u32 %s71, 1
          %s2844 = sand.u32 %s71, 1
          %s2845 = smul.addr %s2844, 256
          %s2846 = scalar_lea.vmem [#allocation3], %s2845
        $region116: #{aatm_forward.1} parent=111 // pred_fallthru
          _
        // Predicated region
        $region117: #{aatm_forward.1} parent=111 // pred_check
          %p2847 = pneg %p112
        $region118: #{aatm_forward.1} parent=111 // pred_check_branch
          %2849 = sbr.rel (%p2847) target = $region120
        $region119: #{aatm_forward.1} parent=111 // pred_region
          %p2850 = scmp.lt.s32.totalorder %s16, 1
          %s2851 = scalar_select %p2850, %s16, 1
          %s2852 = smul.addr %s2851, 2
          %s2853 = scalar_lea.vmem %s3, %s2852
        $region120: #{aatm_forward.1} parent=111 // pred_fallthru
          _
      $region112: #{aatm_forward.1} parent=5 // pred_fallthru
        _
    $region6: #{aatm_forward.1} parent=1 // loop_footer
      %s14 = sadd.s32 1, %s10
    $region7: #{aatm_forward.1} parent=1 // loop_footer_branch
      %9 = sbr.rel target = $region3
    $region8: #{aatm_forward.1} parent=1 // loop_exit
      _

</llo_original>
